<compile_context>
chip_gen: v5e
topology: v5e:2x2
jax: 0.10.0
libtpu: 0.0.40
codegen_flags: <defaults>
</compile_context>

<pallas_src>
import jax
import jax.numpy as jnp
from jax import lax
from jax.experimental import pallas as pl
from jax.experimental.pallas import tpu as pltpu


def _round_up(x, m):
    return ((x + m - 1) // m) * m


def global_sa_kernel(x_ref, pos_ref, batch_ref,
                     w1x_ref, w1p_ref, b1_ref,
                     w2_ref, b2_ref, w3_ref, b3_ref,
                     out_ref):
    """One point tile: shared MLP, then one-hot segment-sum into the resident
    per-shard output block.

    x_ref    : [tn, C_in]  bf16 point features
    pos_ref  : [tn, 3]     bf16 point positions
    batch_ref: [tn, 1]     int32 batch id per point (-1 for padded rows)
    out_ref  : [B, Cout]   f32 per-shard partial segment sums (resident across
                           the inner "arbitrary" grid axis)
    """
    i = pl.program_id(1)   # inner (point-tile) axis; axis 0 is the shard axis

    @pl.when(i == 0)
    def _():
        out_ref[...] = jnp.zeros_like(out_ref)

    # ---- shared MLP; concat(x, pos) @ w1 fused as two partial matmuls ------
    h = (jnp.dot(x_ref[...], w1x_ref[...], preferred_element_type=jnp.float32)
         + jnp.dot(pos_ref[...], w1p_ref[...], preferred_element_type=jnp.float32)
         + b1_ref[...])
    h = jnp.maximum(h, 0.0)
    h = jnp.dot(h.astype(w2_ref.dtype), w2_ref[...],
                preferred_element_type=jnp.float32) + b2_ref[...]
    h = jnp.maximum(h, 0.0)
    h = jnp.dot(h.astype(w3_ref.dtype), w3_ref[...],
                preferred_element_type=jnp.float32) + b3_ref[...]

    # ---- segment sum (global_mean_pool numerator) via one-hot matmul -------
    # bf16 operands (one-hot is exact in bf16), f32 MXU accumulation.
    tn = x_ref.shape[0]
    n_batch = out_ref.shape[0]
    onehot = (batch_ref[...] ==
              lax.broadcasted_iota(jnp.int32, (tn, n_batch), 1)
              ).astype(jnp.bfloat16)                    # [tn, B]; pad rows -> 0
    out_ref[...] += lax.dot_general(
        onehot, h.astype(jnp.bfloat16),
        dimension_numbers=(((0,), (0,)), ((), ())),
        preferred_element_type=jnp.float32)             # [B, Cout]


def global_sa_module(x, pos, batch, params, *, num_batches,
                     tile_n=512, num_shards=1):
    """GlobalSAModule forward: (x, pos, batch) -> (pooled_x, zeros_pos, arange).

    num_shards > 1 adds a leading "parallel" grid axis (megacore on v7x); the
    tiny [num_shards, B, Cout] partial combine happens in the wrapper.
    """
    n_pts, c_in = x.shape
    w1, b1, w2, b2, w3, b3 = params
    h1, h2, cout = w1.shape[1], w2.shape[1], w3.shape[1]

    # Split the first-layer weight so concat([x, pos]) never materializes.
    w1x, w1p = w1[:c_in], w1[c_in:]

    # bf16 point stream + weights (kernel is memory-bound); f32 accumulation.
    cdt = jnp.bfloat16
    x_b = x.astype(cdt)
    pos_b = pos.astype(cdt)
    w1x_b, w1p_b, w2_b, w3_b = (w.astype(cdt) for w in (w1x, w1p, w2, w3))
    b1_f, b2_f, b3_f = (b.astype(jnp.float32) for b in (b1, b2, b3))

    # Pad the point axis so it divides num_shards * tile_n; padded rows get
    # batch = -1 so the one-hot reduction drops them.
    n_pad = _round_up(max(n_pts, 1), num_shards * tile_n)
    pad = n_pad - n_pts
    x_b = jnp.pad(x_b, ((0, pad), (0, 0)))
    pos_b = jnp.pad(pos_b, ((0, pad), (0, 0)))
    batch2d = jnp.pad(batch.astype(jnp.int32), (0, pad),
                      constant_values=-1).reshape(n_pad, 1)

    tiles_per_shard = n_pad // (num_shards * tile_n)
    grid = (num_shards, tiles_per_shard)

    def pt_map(s, i):
        return (s * tiles_per_shard + i, 0)

    const = lambda s, i: (0, 0)

    partials = pl.pallas_call(
        global_sa_kernel,
        out_shape=jax.ShapeDtypeStruct((num_shards, num_batches, cout),
                                       jnp.float32),
        grid_spec=pltpu.PrefetchScalarGridSpec(
            num_scalar_prefetch=0,
            grid=grid,
            in_specs=[
                pl.BlockSpec((tile_n, c_in), pt_map),     # x tile        (bf16)
                pl.BlockSpec((tile_n, 3), pt_map),        # pos tile      (bf16)
                pl.BlockSpec((tile_n, 1), pt_map),        # batch tile    (i32)
                pl.BlockSpec((c_in, h1), const),          # w1[:c_in]     (bf16)
                pl.BlockSpec((3, h1), const),             # w1[c_in:]     (bf16)
                pl.BlockSpec((1, h1), const),             # b1            (f32)
                pl.BlockSpec((h1, h2), const),            # w2            (bf16)
                pl.BlockSpec((1, h2), const),             # b2            (f32)
                pl.BlockSpec((h2, cout), const),          # w3            (bf16)
                pl.BlockSpec((1, cout), const),           # b3            (f32)
            ],
            out_specs=pl.BlockSpec((None, num_batches, cout),
                                   lambda s, i: (s, 0, 0)),
        ),
        compiler_params=pltpu.CompilerParams(
            dimension_semantics=("parallel", "arbitrary")),
    )(x_b, pos_b, batch2d, w1x_b, w1p_b, b1_f, w2_b, b2_f, w3_b, b3_f)

    # Tiny [num_shards, B, Cout] combine + mean normalization (wrapper glue;
    # counts depend only on `batch`, so they never touch the kernel).
    counts = jnp.zeros((num_batches, 1), jnp.float32).at[batch, 0].add(1.0)
    x_out = partials.sum(axis=0) / counts

    pos_out = jnp.zeros((num_batches, 3), dtype=pos.dtype)
    batch_out = jnp.arange(num_batches, dtype=jnp.int32)
    return x_out, pos_out, batch_out


def _reference(x, pos, batch, params, num_batches):
    w1, b1, w2, b2, w3, b3 = params
    feat = jnp.concatenate([x, pos], axis=1)
    h = jnp.maximum(feat @ w1 + b1, 0.0)
    h = jnp.maximum(h @ w2 + b2, 0.0)
    h = h @ w3 + b3
    sums = jnp.zeros((num_batches, h.shape[1]), jnp.float32).at[batch].add(h)
    cnts = jnp.zeros((num_batches, 1), jnp.float32).at[batch, 0].add(1.0)
    return sums / cnts


if __name__ == "__main__":
    key = jax.random.PRNGKey(0)
    N, B = 64, 2           # points, batches
    C_IN = 4               # per-point feature channels
    H1, H2, C_OUT = 32, 32, 32

    k = jax.random.split(key, 9)
    x = jax.random.normal(k[0], (N, C_IN), jnp.float32)
    pos = jax.random.normal(k[1], (N, 3), jnp.float32)
    batch = jnp.concatenate(
        [jnp.zeros((N // 2,), jnp.int32), jnp.ones((N // 2,), jnp.int32)])

    cin = C_IN + 3
    params = (
        jax.random.normal(k[2], (cin, H1), jnp.float32) * (1.0 / cin) ** 0.5,
        jax.random.normal(k[3], (1, H1), jnp.float32) * 0.01,
        jax.random.normal(k[4], (H1, H2), jnp.float32) * (1.0 / H1) ** 0.5,
        jax.random.normal(k[5], (1, H2), jnp.float32) * 0.01,
        jax.random.normal(k[6], (H2, C_OUT), jnp.float32) * (1.0 / H2) ** 0.5,
        jax.random.normal(k[7], (1, C_OUT), jnp.float32) * 0.01,
    )

    ref = _reference(x, pos, batch, params, B)

    # Single-core path (v5e/v6e default).
    x_out, pos_out, batch_out = global_sa_module(
        x, pos, batch, params, num_batches=B, tile_n=512, num_shards=1)
    jax.block_until_ready((x_out, pos_out, batch_out))
    assert x_out.shape == (B, C_OUT)
    assert pos_out.shape == (B, 3)
    assert batch_out.shape == (B,)
    assert jnp.allclose(x_out, ref, atol=5e-2, rtol=5e-2)

    # Sharded path (leading "parallel" axis; uses the 2nd TensorCore on v7x).
    x_out2, _, _ = global_sa_module(
        x, pos, batch, params, num_batches=B, tile_n=512, num_shards=2)
    jax.block_until_ready(x_out2)
    assert jnp.allclose(x_out2, ref, atol=5e-2, rtol=5e-2)

    print("KERNEL_OK")
</pallas_src>

<mosaic_0001>
module attributes {stable_mosaic.version = 11 : i64} {
  func.func @global_sa_kernel(%arg0: i32, %arg1: i32, %arg2: memref<512x4xbf16, #tpu.memory_space<vmem>>, %arg3: memref<512x3xbf16, #tpu.memory_space<vmem>>, %arg4: memref<512x1xi32, #tpu.memory_space<vmem>>, %arg5: memref<4x32xbf16, #tpu.memory_space<vmem>>, %arg6: memref<3x32xbf16, #tpu.memory_space<vmem>>, %arg7: memref<1x32xf32, #tpu.memory_space<vmem>>, %arg8: memref<32x32xbf16, #tpu.memory_space<vmem>>, %arg9: memref<1x32xf32, #tpu.memory_space<vmem>>, %arg10: memref<32x32xbf16, #tpu.memory_space<vmem>>, %arg11: memref<1x32xf32, #tpu.memory_space<vmem>>, %arg12: memref<1x2x32xf32, #tpu.memory_space<vmem>>) attributes {dimension_semantics = [#tpu.dimension_semantics<parallel>, #tpu.dimension_semantics<arbitrary>], iteration_bounds = array<i64: 1, 1>, scalar_prefetch = 0 : i64, scratch_operands = 0 : i64, tpu.core_type = #tpu.core_type<tc>, window_params = [{transform_indices = @transform_0, window_bounds = array<i64: 512, 4>}, {transform_indices = @transform_1, window_bounds = array<i64: 512, 3>}, {transform_indices = @transform_2, window_bounds = array<i64: 512, 1>}, {pipeline_mode = #tpu.pipeline_mode<synchronous>, transform_indices = @transform_3, window_bounds = array<i64: 4, 32>}, {pipeline_mode = #tpu.pipeline_mode<synchronous>, transform_indices = @transform_4, window_bounds = array<i64: 3, 32>}, {pipeline_mode = #tpu.pipeline_mode<synchronous>, transform_indices = @transform_5, window_bounds = array<i64: 1, 32>}, {pipeline_mode = #tpu.pipeline_mode<synchronous>, transform_indices = @transform_6, window_bounds = array<i64: 32, 32>}, {pipeline_mode = #tpu.pipeline_mode<synchronous>, transform_indices = @transform_7, window_bounds = array<i64: 1, 32>}, {pipeline_mode = #tpu.pipeline_mode<synchronous>, transform_indices = @transform_8, window_bounds = array<i64: 32, 32>}, {pipeline_mode = #tpu.pipeline_mode<synchronous>, transform_indices = @transform_9, window_bounds = array<i64: 1, 32>}, {transform_indices = @transform_10, window_bounds = array<i64: 1, 2, 32>}]} {
    %c0_i32 = arith.constant 0 : i32
    %0 = arith.cmpi eq, %arg1, %c0_i32 : i32
    %1 = arith.extui %0 : i1 to i32
    %c0_i32_0 = arith.constant 0 : i32
    %2 = arith.cmpi ne, %1, %c0_i32_0 : i32
    scf.if %2 {
      %cst_32 = arith.constant 0.000000e+00 : f32
      %44 = vector.broadcast %cst_32 : f32 to vector<2x32xf32>
      %c0_33 = arith.constant 0 : index
      %c0_34 = arith.constant 0 : index
      %c0_35 = arith.constant 0 : index
      %45 = vector.load %arg12[%c0_33, %c0_34, %c0_35] : memref<1x2x32xf32, #tpu.memory_space<vmem>>, vector<1x2x32xf32>
      %46 = vector.shape_cast %45 : vector<1x2x32xf32> to vector<2x32xf32>
      %47 = vector.shape_cast %44 : vector<2x32xf32> to vector<1x2x32xf32>
      tpu.vector_store %arg12[%c0_33, %c0_34, %c0_35], %47 {strides = array<i32>} : memref<1x2x32xf32, #tpu.memory_space<vmem>>, vector<1x2x32xf32>,
    } else {
    }
    %c0 = arith.constant 0 : index
    %c0_1 = arith.constant 0 : index
    %3 = vector.load %arg2[%c0, %c0_1] : memref<512x4xbf16, #tpu.memory_space<vmem>>, vector<512x4xbf16>
    %c0_2 = arith.constant 0 : index
    %c0_3 = arith.constant 0 : index
    %4 = vector.load %arg5[%c0_2, %c0_3] : memref<4x32xbf16, #tpu.memory_space<vmem>>, vector<4x32xbf16>
    %cst = arith.constant dense<0.000000e+00> : vector<512x32xf32>
    %5 = tpu.matmul %3, %4, %cst {dimension_numbers = #tpu.dot_dimension_numbers<[1], [0], [0], [1], [0, 0, 1, 1], [], []>} : vector<512x4xbf16>, vector<4x32xbf16>, vector<512x32xf32> -> vector<512x32xf32>
    %c0_4 = arith.constant 0 : index
    %c0_5 = arith.constant 0 : index
    %6 = vector.load %arg3[%c0_4, %c0_5] : memref<512x3xbf16, #tpu.memory_space<vmem>>, vector<512x3xbf16>
    %c0_6 = arith.constant 0 : index
    %c0_7 = arith.constant 0 : index
    %7 = vector.load %arg6[%c0_6, %c0_7] : memref<3x32xbf16, #tpu.memory_space<vmem>>, vector<3x32xbf16>
    %cst_8 = arith.constant dense<0.000000e+00> : vector<512x32xf32>
    %8 = tpu.matmul %6, %7, %cst_8 {dimension_numbers = #tpu.dot_dimension_numbers<[1], [0], [0], [1], [0, 0, 1, 1], [], []>} : vector<512x3xbf16>, vector<3x32xbf16>, vector<512x32xf32> -> vector<512x32xf32>
    %9 = arith.addf %5, %8 : vector<512x32xf32>
    %c0_9 = arith.constant 0 : index
    %c0_10 = arith.constant 0 : index
    %10 = vector.load %arg7[%c0_9, %c0_10] : memref<1x32xf32, #tpu.memory_space<vmem>>, vector<1x32xf32>
    %11 = vector.broadcast %10 : vector<1x32xf32> to vector<512x32xf32>
    %12 = arith.addf %9, %11 : vector<512x32xf32>
    %cst_11 = arith.constant 0.000000e+00 : f32
    %13 = vector.broadcast %cst_11 : f32 to vector<512x32xf32>
    %14 = arith.maximumf %12, %13 : vector<512x32xf32>
    %15 = arith.truncf %14 : vector<512x32xf32> to vector<512x32xbf16>
    %c0_12 = arith.constant 0 : index
    %c0_13 = arith.constant 0 : index
    %16 = vector.load %arg8[%c0_12, %c0_13] : memref<32x32xbf16, #tpu.memory_space<vmem>>, vector<32x32xbf16>
    %cst_14 = arith.constant dense<0.000000e+00> : vector<512x32xf32>
    %17 = tpu.matmul %15, %16, %cst_14 {dimension_numbers = #tpu.dot_dimension_numbers<[1], [0], [0], [1], [0, 0, 1, 1], [], []>} : vector<512x32xbf16>, vector<32x32xbf16>, vector<512x32xf32> -> vector<512x32xf32>
    %c0_15 = arith.constant 0 : index
    %c0_16 = arith.constant 0 : index
    %18 = vector.load %arg9[%c0_15, %c0_16] : memref<1x32xf32, #tpu.memory_space<vmem>>, vector<1x32xf32>
    %19 = vector.broadcast %18 : vector<1x32xf32> to vector<512x32xf32>
    %20 = arith.addf %17, %19 : vector<512x32xf32>
    %cst_17 = arith.constant 0.000000e+00 : f32
    %21 = vector.broadcast %cst_17 : f32 to vector<512x32xf32>
    %22 = arith.maximumf %20, %21 : vector<512x32xf32>
    %23 = arith.truncf %22 : vector<512x32xf32> to vector<512x32xbf16>
    %c0_18 = arith.constant 0 : index
    %c0_19 = arith.constant 0 : index
    %24 = vector.load %arg10[%c0_18, %c0_19] : memref<32x32xbf16, #tpu.memory_space<vmem>>, vector<32x32xbf16>
    %cst_20 = arith.constant dense<0.000000e+00> : vector<512x32xf32>
    %25 = tpu.matmul %23, %24, %cst_20 {dimension_numbers = #tpu.dot_dimension_numbers<[1], [0], [0], [1], [0, 0, 1, 1], [], []>} : vector<512x32xbf16>, vector<32x32xbf16>, vector<512x32xf32> -> vector<512x32xf32>
    %c0_21 = arith.constant 0 : index
    %c0_22 = arith.constant 0 : index
    %26 = vector.load %arg11[%c0_21, %c0_22] : memref<1x32xf32, #tpu.memory_space<vmem>>, vector<1x32xf32>
    %27 = vector.broadcast %26 : vector<1x32xf32> to vector<512x32xf32>
    %28 = arith.addf %25, %27 : vector<512x32xf32>
    %c0_23 = arith.constant 0 : index
    %c0_24 = arith.constant 0 : index
    %29 = vector.load %arg4[%c0_23, %c0_24] : memref<512x1xi32, #tpu.memory_space<vmem>>, vector<512x1xi32>
    %30 = tpu.iota {dimensions = array<i32: 1>} : vector<512x2xi32>
    %31 = vector.broadcast %29 : vector<512x1xi32> to vector<512x2xi32>
    %32 = arith.cmpi eq, %31, %30 : vector<512x2xi32>
    %33 = arith.extui %32 : vector<512x2xi1> to vector<512x2xi32>
    %34 = arith.sitofp %33 : vector<512x2xi32> to vector<512x2xf32>
    %35 = arith.truncf %34 : vector<512x2xf32> to vector<512x2xbf16>
    %c0_25 = arith.constant 0 : index
    %c0_26 = arith.constant 0 : index
    %c0_27 = arith.constant 0 : index
    %36 = vector.load %arg12[%c0_25, %c0_26, %c0_27] : memref<1x2x32xf32, #tpu.memory_space<vmem>>, vector<1x2x32xf32>
    %37 = vector.shape_cast %36 : vector<1x2x32xf32> to vector<2x32xf32>
    %38 = arith.truncf %28 : vector<512x32xf32> to vector<512x32xbf16>
    %cst_28 = arith.constant dense<0.000000e+00> : vector<2x32xf32>
    %39 = tpu.matmul %35, %38, %cst_28 {dimension_numbers = #tpu.dot_dimension_numbers<[0], [0], [1], [1], [0, 1, 1, 1], [], []>} : vector<512x2xbf16>, vector<512x32xbf16>, vector<2x32xf32> -> vector<2x32xf32>
    %40 = arith.addf %37, %39 : vector<2x32xf32>
    %c0_29 = arith.constant 0 : index
    %c0_30 = arith.constant 0 : index
    %c0_31 = arith.constant 0 : index
    %41 = vector.load %arg12[%c0_29, %c0_30, %c0_31] : memref<1x2x32xf32, #tpu.memory_space<vmem>>, vector<1x2x32xf32>
    %42 = vector.shape_cast %41 : vector<1x2x32xf32> to vector<2x32xf32>
    %43 = vector.shape_cast %40 : vector<2x32xf32> to vector<1x2x32xf32>
    tpu.vector_store %arg12[%c0_29, %c0_30, %c0_31], %43 {strides = array<i32>} : memref<1x2x32xf32, #tpu.memory_space<vmem>>, vector<1x2x32xf32>,
    return
  }
  func.func @transform_0(%arg0: i32, %arg1: i32) -> (i32, i32) {
    %c1_i32 = arith.constant 1 : i32
    %0 = arith.muli %arg0, %c1_i32 : i32
    %1 = arith.addi %0, %arg1 : i32
    %c0_i32 = arith.constant 0 : i32
    %c0_i32_0 = arith.constant 0 : i32
    return %1, %c0_i32 : i32, i32
  }
  func.func @transform_1(%arg0: i32, %arg1: i32) -> (i32, i32) {
    %c1_i32 = arith.constant 1 : i32
    %0 = arith.muli %arg0, %c1_i32 : i32
    %1 = arith.addi %0, %arg1 : i32
    %c0_i32 = arith.constant 0 : i32
    %c0_i32_0 = arith.constant 0 : i32
    return %1, %c0_i32 : i32, i32
  }
  func.func @transform_2(%arg0: i32, %arg1: i32) -> (i32, i32) {
    %c1_i32 = arith.constant 1 : i32
    %0 = arith.muli %arg0, %c1_i32 : i32
    %1 = arith.addi %0, %arg1 : i32
    %c0_i32 = arith.constant 0 : i32
    %c0_i32_0 = arith.constant 0 : i32
    return %1, %c0_i32 : i32, i32
  }
  func.func @transform_3(%arg0: i32, %arg1: i32) -> (i32, i32) {
    %c0_i32 = arith.constant 0 : i32
    %c0_i32_0 = arith.constant 0 : i32
    %c0_i32_1 = arith.constant 0 : i32
    return %c0_i32, %c0_i32_0 : i32, i32
  }
  func.func @transform_4(%arg0: i32, %arg1: i32) -> (i32, i32) {
    %c0_i32 = arith.constant 0 : i32
    %c0_i32_0 = arith.constant 0 : i32
    %c0_i32_1 = arith.constant 0 : i32
    return %c0_i32, %c0_i32_0 : i32, i32
  }
  func.func @transform_5(%arg0: i32, %arg1: i32) -> (i32, i32) {
    %c0_i32 = arith.constant 0 : i32
    %c0_i32_0 = arith.constant 0 : i32
    %c0_i32_1 = arith.constant 0 : i32
    return %c0_i32, %c0_i32_0 : i32, i32
  }
  func.func @transform_6(%arg0: i32, %arg1: i32) -> (i32, i32) {
    %c0_i32 = arith.constant 0 : i32
    %c0_i32_0 = arith.constant 0 : i32
    %c0_i32_1 = arith.constant 0 : i32
    return %c0_i32, %c0_i32_0 : i32, i32
  }
  func.func @transform_7(%arg0: i32, %arg1: i32) -> (i32, i32) {
    %c0_i32 = arith.constant 0 : i32
    %c0_i32_0 = arith.constant 0 : i32
    %c0_i32_1 = arith.constant 0 : i32
    return %c0_i32, %c0_i32_0 : i32, i32
  }
  func.func @transform_8(%arg0: i32, %arg1: i32) -> (i32, i32) {
    %c0_i32 = arith.constant 0 : i32
    %c0_i32_0 = arith.constant 0 : i32
    %c0_i32_1 = arith.constant 0 : i32
    return %c0_i32, %c0_i32_0 : i32, i32
  }
  func.func @transform_9(%arg0: i32, %arg1: i32) -> (i32, i32) {
    %c0_i32 = arith.constant 0 : i32
    %c0_i32_0 = arith.constant 0 : i32
    %c0_i32_1 = arith.constant 0 : i32
    return %c0_i32, %c0_i32_0 : i32, i32
  }
  func.func @transform_10(%arg0: i32, %arg1: i32) -> (i32, i32, i32) {
    %c0_i32 = arith.constant 0 : i32
    %c0_i32_0 = arith.constant 0 : i32
    %c0_i32_1 = arith.constant 0 : i32
    return %arg0, %c0_i32, %c0_i32_0 : i32, i32, i32
  }
}

</mosaic_0001>

<llo_original>
// kernel: tpu_custom_call.1
$region0: #{tpu_custom_call.1}
  #allocation0 [shape = 'u32[]', space=smem, size = 0x4, offset = 0x4, fixed_abs, tag = 'smem constant byte address 0x4 - core index']
  #allocation1 [shape = 'u32[72,128]{1,0:T(1,128)}', space=vmem, size = 0x9000, scoped, tag = 'internal scratch']
  %s0 = inlined_call_operand.vmem [shape: bf16[512,4], index: 0, kind: input, shape index: {}]
  %s1 = inlined_call_operand.vmem [shape: bf16[512,3], index: 1, kind: input, shape index: {}]
  %s2 = inlined_call_operand.vmem [shape: s32[512,1], index: 2, kind: input, shape index: {}]
  %s3 = inlined_call_operand.vmem [shape: bf16[4,32], index: 3, kind: input, shape index: {}]
  %s4 = inlined_call_operand.vmem [shape: bf16[3,32], index: 4, kind: input, shape index: {}]
  %s5 = inlined_call_operand.vmem [shape: f32[1,32], index: 5, kind: input, shape index: {}]
  %s6 = inlined_call_operand.vmem [shape: bf16[32,32], index: 6, kind: input, shape index: {}]
  %s7 = inlined_call_operand.vmem [shape: f32[1,32], index: 7, kind: input, shape index: {}]
  %s8 = inlined_call_operand.vmem [shape: bf16[32,32], index: 8, kind: input, shape index: {}]
  %s9 = inlined_call_operand.vmem [shape: f32[1,32], index: 9, kind: input, shape index: {}]
  %s10 = inlined_call_operand.hbm [shape: f32[1,2,32], index: 10, kind: output, shape index: {}]
  %s11 = sld [smem:[#allocation0]]
  $region54: #{tpu_custom_call.1} parent=0
    _
  %s13 = ssub.s32 1, %s11
  %s14 = scalar_select 0, %s13, %s11
  $region1: #{tpu_custom_call.1} parent=0
    #allocation2 [shape = 'u8[1024]{0}', space=vmem, size = 0x400, scoped, tag = 'output window, operand 0, single buffered']
    #allocation3 [shape = 's32[1]{0}', space=sflag, size = 0x4, scoped, tag = 'scoped memory for tpu_custom_call.1']
    %15 = vsyncpa [#allocation3], 0
    // Predicated region
    $region2: #{tpu_custom_call.1} parent=1 // pred_check
      _
    $region3: #{tpu_custom_call.1} parent=1 // pred_check_branch
      %17 = sbr.rel (0) target = $region5
    $region4: #{tpu_custom_call.1} parent=1 // pred_region
      %s18 = sadd.s32 0, 0
      %s19 = smul.u32 64, %s18
      %p20 = scmp.lt.s32.totalorder %s19, 63
      %s21 = scalar_select %p20, %s19, 63
      %s22 = smul.addr %s21, 4
      %s23 = scalar_lea.vmem %s0, %s22
      %s24 = sadd.s32 0, 0
      %s25 = smul.u32 64, %s24
    $region5: #{tpu_custom_call.1} parent=1 // pred_fallthru
      _
    // Predicated region
    $region6: #{tpu_custom_call.1} parent=1 // pred_check
      _
    $region7: #{tpu_custom_call.1} parent=1 // pred_check_branch
      %27 = sbr.rel (0) target = $region9
    $region8: #{tpu_custom_call.1} parent=1 // pred_region
      %s28 = sadd.s32 0, 0
      %s29 = smul.u32 64, %s28
      %p30 = scmp.lt.s32.totalorder %s29, 63
      %s31 = scalar_select %p30, %s29, 63
      %s32 = smul.addr %s31, 4
      %s33 = scalar_lea.vmem %s1, %s32
      %s34 = sadd.s32 0, 0
      %s35 = smul.u32 64, %s34
    $region9: #{tpu_custom_call.1} parent=1 // pred_fallthru
      _
    // Predicated region
    $region10: #{tpu_custom_call.1} parent=1 // pred_check
      _
    $region11: #{tpu_custom_call.1} parent=1 // pred_check_branch
      %37 = sbr.rel (0) target = $region13
    $region12: #{tpu_custom_call.1} parent=1 // pred_region
      %s38 = sadd.s32 0, 0
      %s39 = smul.u32 64, %s38
      %p40 = scmp.lt.s32.totalorder %s39, 63
      %s41 = scalar_select %p40, %s39, 63
      %s42 = smul.addr %s41, 8
      %s43 = scalar_lea.vmem %s2, %s42
      %s44 = sadd.s32 0, 0
      %s45 = smul.u32 64, %s44
    $region13: #{tpu_custom_call.1} parent=1 // pred_fallthru
      _
    // Predicated region
    $region14: #{tpu_custom_call.1} parent=1 // pred_check
      _
    $region15: #{tpu_custom_call.1} parent=1 // pred_check_branch
      %47 = sbr.rel (0) target = $region17
    $region16: #{tpu_custom_call.1} parent=1 // pred_region
      _
    $region17: #{tpu_custom_call.1} parent=1 // pred_fallthru
      _
    // Predicated region
    $region18: #{tpu_custom_call.1} parent=1 // pred_check
      _
    $region19: #{tpu_custom_call.1} parent=1 // pred_check_branch
      %49 = sbr.rel (0) target = $region21
    $region20: #{tpu_custom_call.1} parent=1 // pred_region
      _
    $region21: #{tpu_custom_call.1} parent=1 // pred_fallthru
      _
    // Predicated region
    $region22: #{tpu_custom_call.1} parent=1 // pred_check
      _
    $region23: #{tpu_custom_call.1} parent=1 // pred_check_branch
      %51 = sbr.rel (0) target = $region25
    $region24: #{tpu_custom_call.1} parent=1 // pred_region
      _
    $region25: #{tpu_custom_call.1} parent=1 // pred_fallthru
      _
    // Predicated region
    $region26: #{tpu_custom_call.1} parent=1 // pred_check
      _
    $region27: #{tpu_custom_call.1} parent=1 // pred_check_branch
      %53 = sbr.rel (0) target = $region29
    $region28: #{tpu_custom_call.1} parent=1 // pred_region
      _
    $region29: #{tpu_custom_call.1} parent=1 // pred_fallthru
      _
    // Predicated region
    $region30: #{tpu_custom_call.1} parent=1 // pred_check
      _
    $region31: #{tpu_custom_call.1} parent=1 // pred_check_branch
      %55 = sbr.rel (0) target = $region33
    $region32: #{tpu_custom_call.1} parent=1 // pred_region
      _
    $region33: #{tpu_custom_call.1} parent=1 // pred_fallthru
      _
    // Predicated region
    $region34: #{tpu_custom_call.1} parent=1 // pred_check
      _
    $region35: #{tpu_custom_call.1} parent=1 // pred_check_branch
      %57 = sbr.rel (0) target = $region37
    $region36: #{tpu_custom_call.1} parent=1 // pred_region
      _
    $region37: #{tpu_custom_call.1} parent=1 // pred_fallthru
      _
    // Predicated region
    $region38: #{tpu_custom_call.1} parent=1 // pred_check
      _
    $region39: #{tpu_custom_call.1} parent=1 // pred_check_branch
      %59 = sbr.rel (0) target = $region41
    $region40: #{tpu_custom_call.1} parent=1 // pred_region
      _
    $region41: #{tpu_custom_call.1} parent=1 // pred_fallthru
      _
    %s60 = sadd.s32 0, 0
    %s61 = smul.u32 64, %s60
    %p62 = scmp.lt.s32.totalorder %s61, 63
    %s63 = scalar_select %p62, %s61, 63
    %s64 = smul.addr %s63, 4
    %s65 = scalar_lea.vmem %s0, %s64
    %s66 = sadd.s32 0, 0
    %s67 = smul.u32 64, %s66
    %p68 = scmp.lt.s32.totalorder %s67, 63
    %s69 = scalar_select %p68, %s67, 63
    %s70 = smul.addr %s69, 4
    %s71 = scalar_lea.vmem %s1, %s70
    %s72 = sadd.s32 0, 0
    %s73 = smul.u32 64, %s72
    %p74 = scmp.lt.s32.totalorder %s73, 63
    %s75 = scalar_select %p74, %s73, 63
    %s76 = smul.addr %s75, 8
    %s77 = scalar_lea.vmem %s2, %s76
    %s78 = sadd.s32 0, 0
    %s79 = smul.u32 64, %s78
    %p80 = scmp.lt.s32.totalorder %s79, 63
    %s81 = scalar_select %p80, %s79, 63
    %s82 = smul.addr %s81, 4
    %s83 = scalar_lea.vmem %s0, %s82
    %s84 = sadd.s32 0, 0
    %s85 = smul.u32 64, %s84
    %s86 = sadd.s32 0, 0
    %s87 = smul.u32 64, %s86
    %p88 = scmp.lt.s32.totalorder %s87, 63
    %s89 = scalar_select %p88, %s87, 63
    %s90 = smul.addr %s89, 4
    %s91 = scalar_lea.vmem %s1, %s90
    %s92 = sadd.s32 0, 0
    %s93 = smul.u32 64, %s92
    %s94 = sadd.s32 0, 0
    %s95 = smul.u32 64, %s94
    %p96 = scmp.lt.s32.totalorder %s95, 63
    %s97 = scalar_select %p96, %s95, 63
    %s98 = smul.addr %s97, 8
    %s99 = scalar_lea.vmem %s2, %s98
    %s100 = sadd.s32 0, 0
    %s101 = smul.u32 64, %s100
    %p103 = scmp.eq.s32.totalorder 0, 0
    // Predicated region
    $region42: #{tpu_custom_call.1} parent=1 // pred_check
      %p104 = pneg %p103
    $region43: #{tpu_custom_call.1} parent=1 // pred_check_branch
      %106 = sbr.rel (%p104) target = $region45
    $region44: #{tpu_custom_call.1} parent=1 // pred_region
      %vm107 = vcmask 254976
      %108 = vst.msk [vmem:[#allocation2] sm:$0x3] %vm107, 0.0
    $region45: #{tpu_custom_call.1} parent=1 // pred_fallthru
      _
    %v109 = vld [vmem:[%s83] sm:$0xf]
    %v110 = vld [vmem:[%s83 + $0x4] sm:$0xf]
    %v111 = vld [vmem:[%s83 + $0x8] sm:$0xf]
    %v112 = vld [vmem:[%s83 + $0xc] sm:$0xf]
    %v113 = vld [vmem:[%s83 + $0x10] sm:$0xf]
    %v114 = vld [vmem:[%s83 + $0x14] sm:$0xf]
    %v115 = vld [vmem:[%s83 + $0x18] sm:$0xf]
    %v116 = vld [vmem:[%s83 + $0x1c] sm:$0xf]
    %v117 = vld [vmem:[%s83 + $0x20] sm:$0xf]
    %v118 = vld [vmem:[%s83 + $0x24] sm:$0xf]
    %v119 = vld [vmem:[%s83 + $0x28] sm:$0xf]
    %v120 = vld [vmem:[%s83 + $0x2c] sm:$0xf]
    %v121 = vld [vmem:[%s83 + $0x30] sm:$0xf]
    %v122 = vld [vmem:[%s83 + $0x34] sm:$0xf]
    %v123 = vld [vmem:[%s83 + $0x38] sm:$0xf]
    %v124 = vld [vmem:[%s83 + $0x3c] sm:$0xf]
    %v125 = vld [vmem:[%s83 + $0x40] sm:$0xf]
    %v126 = vld [vmem:[%s83 + $0x44] sm:$0xf]
    %v127 = vld [vmem:[%s83 + $0x48] sm:$0xf]
    %v128 = vld [vmem:[%s83 + $0x4c] sm:$0xf]
    %v129 = vld [vmem:[%s83 + $0x50] sm:$0xf]
    %v130 = vld [vmem:[%s83 + $0x54] sm:$0xf]
    %v131 = vld [vmem:[%s83 + $0x58] sm:$0xf]
    %v132 = vld [vmem:[%s83 + $0x5c] sm:$0xf]
    %v133 = vld [vmem:[%s83 + $0x60] sm:$0xf]
    %v134 = vld [vmem:[%s83 + $0x64] sm:$0xf]
    %v135 = vld [vmem:[%s83 + $0x68] sm:$0xf]
    %v136 = vld [vmem:[%s83 + $0x6c] sm:$0xf]
    %v137 = vld [vmem:[%s83 + $0x70] sm:$0xf]
    %v138 = vld [vmem:[%s83 + $0x74] sm:$0xf]
    %v139 = vld [vmem:[%s83 + $0x78] sm:$0xf]
    %v140 = vld [vmem:[%s83 + $0x7c] sm:$0xf]
    %v141 = vld [vmem:[%s83 + $0x80] sm:$0xf]
    %v142 = vld [vmem:[%s83 + $0x84] sm:$0xf]
    %v143 = vld [vmem:[%s83 + $0x88] sm:$0xf]
    %v144 = vld [vmem:[%s83 + $0x8c] sm:$0xf]
    %v145 = vld [vmem:[%s83 + $0x90] sm:$0xf]
    %v146 = vld [vmem:[%s83 + $0x94] sm:$0xf]
    %v147 = vld [vmem:[%s83 + $0x98] sm:$0xf]
    %v148 = vld [vmem:[%s83 + $0x9c] sm:$0xf]
    %v149 = vld [vmem:[%s83 + $0xa0] sm:$0xf]
    %v150 = vld [vmem:[%s83 + $0xa4] sm:$0xf]
    %v151 = vld [vmem:[%s83 + $0xa8] sm:$0xf]
    %v152 = vld [vmem:[%s83 + $0xac] sm:$0xf]
    %v153 = vld [vmem:[%s83 + $0xb0] sm:$0xf]
    %v154 = vld [vmem:[%s83 + $0xb4] sm:$0xf]
    %v155 = vld [vmem:[%s83 + $0xb8] sm:$0xf]
    %v156 = vld [vmem:[%s83 + $0xbc] sm:$0xf]
    %v157 = vld [vmem:[%s83 + $0xc0] sm:$0xf]
    %v158 = vld [vmem:[%s83 + $0xc4] sm:$0xf]
    %v159 = vld [vmem:[%s83 + $0xc8] sm:$0xf]
    %v160 = vld [vmem:[%s83 + $0xcc] sm:$0xf]
    %v161 = vld [vmem:[%s83 + $0xd0] sm:$0xf]
    %v162 = vld [vmem:[%s83 + $0xd4] sm:$0xf]
    %v163 = vld [vmem:[%s83 + $0xd8] sm:$0xf]
    %v164 = vld [vmem:[%s83 + $0xdc] sm:$0xf]
    %v165 = vld [vmem:[%s83 + $0xe0] sm:$0xf]
    %v166 = vld [vmem:[%s83 + $0xe4] sm:$0xf]
    %v167 = vld [vmem:[%s83 + $0xe8] sm:$0xf]
    %v168 = vld [vmem:[%s83 + $0xec] sm:$0xf]
    %v169 = vld [vmem:[%s83 + $0xf0] sm:$0xf]
    %v170 = vld [vmem:[%s83 + $0xf4] sm:$0xf]
    %v171 = vld [vmem:[%s83 + $0xf8] sm:$0xf]
    %v172 = vld [vmem:[%s83 + $0xfc] sm:$0xf]
    %v173 = vld [vmem:[%s3] sm:$0x3]
    %v174 = vld [vmem:[%s91] sm:$0xf]
    %v175 = vld [vmem:[%s91 + $0x4] sm:$0xf]
    %v176 = vld [vmem:[%s91 + $0x8] sm:$0xf]
    %v177 = vld [vmem:[%s91 + $0xc] sm:$0xf]
    %v178 = vld [vmem:[%s91 + $0x10] sm:$0xf]
    %v179 = vld [vmem:[%s91 + $0x14] sm:$0xf]
    %v180 = vld [vmem:[%s91 + $0x18] sm:$0xf]
    %v181 = vld [vmem:[%s91 + $0x1c] sm:$0xf]
    %v182 = vld [vmem:[%s91 + $0x20] sm:$0xf]
    %v183 = vld [vmem:[%s91 + $0x24] sm:$0xf]
    %v184 = vld [vmem:[%s91 + $0x28] sm:$0xf]
    %v185 = vld [vmem:[%s91 + $0x2c] sm:$0xf]
    %v186 = vld [vmem:[%s91 + $0x30] sm:$0xf]
    %v187 = vld [vmem:[%s91 + $0x34] sm:$0xf]
    %v188 = vld [vmem:[%s91 + $0x38] sm:$0xf]
    %v189 = vld [vmem:[%s91 + $0x3c] sm:$0xf]
    %v190 = vld [vmem:[%s91 + $0x40] sm:$0xf]
    %v191 = vld [vmem:[%s91 + $0x44] sm:$0xf]
    %v192 = vld [vmem:[%s91 + $0x48] sm:$0xf]
    %v193 = vld [vmem:[%s91 + $0x4c] sm:$0xf]
    %v194 = vld [vmem:[%s91 + $0x50] sm:$0xf]
    %v195 = vld [vmem:[%s91 + $0x54] sm:$0xf]
    %v196 = vld [vmem:[%s91 + $0x58] sm:$0xf]
    %v197 = vld [vmem:[%s91 + $0x5c] sm:$0xf]
    %v198 = vld [vmem:[%s91 + $0x60] sm:$0xf]
    %v199 = vld [vmem:[%s91 + $0x64] sm:$0xf]
    %v200 = vld [vmem:[%s91 + $0x68] sm:$0xf]
    %v201 = vld [vmem:[%s91 + $0x6c] sm:$0xf]
    %v202 = vld [vmem:[%s91 + $0x70] sm:$0xf]
    %v203 = vld [vmem:[%s91 + $0x74] sm:$0xf]
    %v204 = vld [vmem:[%s91 + $0x78] sm:$0xf]
    %v205 = vld [vmem:[%s91 + $0x7c] sm:$0xf]
    %v206 = vld [vmem:[%s91 + $0x80] sm:$0xf]
    %v207 = vld [vmem:[%s91 + $0x84] sm:$0xf]
    %v208 = vld [vmem:[%s91 + $0x88] sm:$0xf]
    %v209 = vld [vmem:[%s91 + $0x8c] sm:$0xf]
    %v210 = vld [vmem:[%s91 + $0x90] sm:$0xf]
    %v211 = vld [vmem:[%s91 + $0x94] sm:$0xf]
    %v212 = vld [vmem:[%s91 + $0x98] sm:$0xf]
    %v213 = vld [vmem:[%s91 + $0x9c] sm:$0xf]
    %v214 = vld [vmem:[%s91 + $0xa0] sm:$0xf]
    %v215 = vld [vmem:[%s91 + $0xa4] sm:$0xf]
    %v216 = vld [vmem:[%s91 + $0xa8] sm:$0xf]
    %v217 = vld [vmem:[%s91 + $0xac] sm:$0xf]
    %v218 = vld [vmem:[%s91 + $0xb0] sm:$0xf]
    %v219 = vld [vmem:[%s91 + $0xb4] sm:$0xf]
    %v220 = vld [vmem:[%s91 + $0xb8] sm:$0xf]
    %v221 = vld [vmem:[%s91 + $0xbc] sm:$0xf]
    %v222 = vld [vmem:[%s91 + $0xc0] sm:$0xf]
    %v223 = vld [vmem:[%s91 + $0xc4] sm:$0xf]
    %v224 = vld [vmem:[%s91 + $0xc8] sm:$0xf]
    %v225 = vld [vmem:[%s91 + $0xcc] sm:$0xf]
    %v226 = vld [vmem:[%s91 + $0xd0] sm:$0xf]
    %v227 = vld [vmem:[%s91 + $0xd4] sm:$0xf]
    %v228 = vld [vmem:[%s91 + $0xd8] sm:$0xf]
    %v229 = vld [vmem:[%s91 + $0xdc] sm:$0xf]
    %v230 = vld [vmem:[%s91 + $0xe0] sm:$0xf]
    %v231 = vld [vmem:[%s91 + $0xe4] sm:$0xf]
    %v232 = vld [vmem:[%s91 + $0xe8] sm:$0xf]
    %v233 = vld [vmem:[%s91 + $0xec] sm:$0xf]
    %v234 = vld [vmem:[%s91 + $0xf0] sm:$0xf]
    %v235 = vld [vmem:[%s91 + $0xf4] sm:$0xf]
    %v236 = vld [vmem:[%s91 + $0xf8] sm:$0xf]
    %v237 = vld [vmem:[%s91 + $0xfc] sm:$0xf]
    %v238 = vld [vmem:[%s4] sm:$0x3]
    %v303 = vunpack.c.l.b16 %v174
    %v304 = vunpack.c.l.b16 %v175
    %v305 = vunpack.c.l.b16 %v176
    %v306 = vunpack.c.l.b16 %v177
    %v307 = vunpack.c.l.b16 %v178
    %v308 = vunpack.c.l.b16 %v179
    %v309 = vunpack.c.l.b16 %v180
    %v310 = vunpack.c.l.b16 %v181
    %v311 = vunpack.c.l.b16 %v182
    %v312 = vunpack.c.l.b16 %v183
    %v313 = vunpack.c.l.b16 %v184
    %v314 = vunpack.c.l.b16 %v185
    %v315 = vunpack.c.l.b16 %v186
    %v316 = vunpack.c.l.b16 %v187
    %v317 = vunpack.c.l.b16 %v188
    %v318 = vunpack.c.l.b16 %v189
    %v319 = vunpack.c.l.b16 %v190
    %v320 = vunpack.c.l.b16 %v191
    %v321 = vunpack.c.l.b16 %v192
    %v322 = vunpack.c.l.b16 %v193
    %v323 = vunpack.c.l.b16 %v194
    %v324 = vunpack.c.l.b16 %v195
    %v325 = vunpack.c.l.b16 %v196
    %v326 = vunpack.c.l.b16 %v197
    %v327 = vunpack.c.l.b16 %v198
    %v328 = vunpack.c.l.b16 %v199
    %v329 = vunpack.c.l.b16 %v200
    %v330 = vunpack.c.l.b16 %v201
    %v331 = vunpack.c.l.b16 %v202
    %v332 = vunpack.c.l.b16 %v203
    %v333 = vunpack.c.l.b16 %v204
    %v334 = vunpack.c.l.b16 %v205
    %v335 = vunpack.c.l.b16 %v206
    %v336 = vunpack.c.l.b16 %v207
    %v337 = vunpack.c.l.b16 %v208
    %v338 = vunpack.c.l.b16 %v209
    %v339 = vunpack.c.l.b16 %v210
    %v340 = vunpack.c.l.b16 %v211
    %v341 = vunpack.c.l.b16 %v212
    %v342 = vunpack.c.l.b16 %v213
    %v343 = vunpack.c.l.b16 %v214
    %v344 = vunpack.c.l.b16 %v215
    %v345 = vunpack.c.l.b16 %v216
    %v346 = vunpack.c.l.b16 %v217
    %v347 = vunpack.c.l.b16 %v218
    %v348 = vunpack.c.l.b16 %v219
    %v349 = vunpack.c.l.b16 %v220
    %v350 = vunpack.c.l.b16 %v221
    %v351 = vunpack.c.l.b16 %v222
    %v352 = vunpack.c.l.b16 %v223
    %v353 = vunpack.c.l.b16 %v224
    %v354 = vunpack.c.l.b16 %v225
    %v355 = vunpack.c.l.b16 %v226
    %v356 = vunpack.c.l.b16 %v227
    %v357 = vunpack.c.l.b16 %v228
    %v358 = vunpack.c.l.b16 %v229
    %v359 = vunpack.c.l.b16 %v230
    %v360 = vunpack.c.l.b16 %v231
    %v361 = vunpack.c.l.b16 %v232
    %v362 = vunpack.c.l.b16 %v233
    %v363 = vunpack.c.l.b16 %v234
    %v364 = vunpack.c.l.b16 %v235
    %v365 = vunpack.c.l.b16 %v236
    %v366 = vunpack.c.l.b16 %v237
    %v367 = vpack.c.b16 %v304, %v303
    %v368 = vpack.c.b16 %v306, %v305
    %v369 = vpack.c.b16 %v308, %v307
    %v370 = vpack.c.b16 %v310, %v309
    %v371 = vpack.c.b16 %v312, %v311
    %v372 = vpack.c.b16 %v314, %v313
    %v373 = vpack.c.b16 %v316, %v315
    %v374 = vpack.c.b16 %v318, %v317
    %v375 = vpack.c.b16 %v320, %v319
    %v376 = vpack.c.b16 %v322, %v321
    %v377 = vpack.c.b16 %v324, %v323
    %v378 = vpack.c.b16 %v326, %v325
    %v379 = vpack.c.b16 %v328, %v327
    %v380 = vpack.c.b16 %v330, %v329
    %v381 = vpack.c.b16 %v332, %v331
    %v382 = vpack.c.b16 %v334, %v333
    %v383 = vpack.c.b16 %v336, %v335
    %v384 = vpack.c.b16 %v338, %v337
    %v385 = vpack.c.b16 %v340, %v339
    %v386 = vpack.c.b16 %v342, %v341
    %v387 = vpack.c.b16 %v344, %v343
    %v388 = vpack.c.b16 %v346, %v345
    %v389 = vpack.c.b16 %v348, %v347
    %v390 = vpack.c.b16 %v350, %v349
    %v391 = vpack.c.b16 %v352, %v351
    %v392 = vpack.c.b16 %v354, %v353
    %v393 = vpack.c.b16 %v356, %v355
    %v394 = vpack.c.b16 %v358, %v357
    %v395 = vpack.c.b16 %v360, %v359
    %v396 = vpack.c.b16 %v362, %v361
    %v397 = vpack.c.b16 %v364, %v363
    %v398 = vpack.c.b16 %v366, %v365
    %vm399 = vcmask 23552
    %v401 = vsel %vm399, %v367, 0
    %v404 = vsel %vm399, %v368, 0
    %v407 = vsel %vm399, %v369, 0
    %v410 = vsel %vm399, %v370, 0
    %v413 = vsel %vm399, %v371, 0
    %v416 = vsel %vm399, %v372, 0
    %v419 = vsel %vm399, %v373, 0
    %v422 = vsel %vm399, %v374, 0
    %v425 = vsel %vm399, %v375, 0
    %v428 = vsel %vm399, %v376, 0
    %v431 = vsel %vm399, %v377, 0
    %v434 = vsel %vm399, %v378, 0
    %v437 = vsel %vm399, %v379, 0
    %v440 = vsel %vm399, %v380, 0
    %v443 = vsel %vm399, %v381, 0
    %v446 = vsel %vm399, %v382, 0
    %v449 = vsel %vm399, %v383, 0
    %v452 = vsel %vm399, %v384, 0
    %v455 = vsel %vm399, %v385, 0
    %v458 = vsel %vm399, %v386, 0
    %v461 = vsel %vm399, %v387, 0
    %v464 = vsel %vm399, %v388, 0
    %v467 = vsel %vm399, %v389, 0
    %v470 = vsel %vm399, %v390, 0
    %v473 = vsel %vm399, %v391, 0
    %v476 = vsel %vm399, %v392, 0
    %v479 = vsel %vm399, %v393, 0
    %v482 = vsel %vm399, %v394, 0
    %v485 = vsel %vm399, %v395, 0
    %v488 = vsel %vm399, %v396, 0
    %v491 = vsel %vm399, %v397, 0
    %v494 = vsel %vm399, %v398, 0
    %vm496 = vcmask 1040384
    %vm497 = vcmask 1041408
    %v498 = vsel %vm496, 4294967295, 65535
    %v499 = vsel %vm497, %v498, 0
    %v501 = vand.u32 %v238, %v499
    %503 = vmatpush.bf16.msra.mxu0 0
    %504 = vmatpush.bf16.msra.mxu0 0
    %505 = vmatpush.bf16.msra.mxu0 0
    %506 = vmatpush.bf16.msra.mxu0 0
    %507 = vmatpush.bf16.msra.mxu0 0
    %508 = vmatpush.bf16.msra.mxu0 0
    %509 = vmatpush.bf16.msra.mxu0 0
    %510 = vmatpush.bf16.msra.mxu0 %v501
    %511 = vmatmul.bf16.gmra.mxu0 %v401
    %v512 = vpop.f32.mrf.mxu0
    %v513 = vadd.f32 0.0, %v512
    %v514 = vpop.f32.mrf.mxu0
    %v515 = vadd.f32 0.0, %v514
    %516 = vmatmul.bf16.gmra.mxu0 %v404
    %v517 = vpop.f32.mrf.mxu0
    %v518 = vadd.f32 0.0, %v517
    %v519 = vpop.f32.mrf.mxu0
    %v520 = vadd.f32 0.0, %v519
    %521 = vmatmul.bf16.gmra.mxu0 %v407
    %v522 = vpop.f32.mrf.mxu0
    %v523 = vadd.f32 0.0, %v522
    %v524 = vpop.f32.mrf.mxu0
    %v525 = vadd.f32 0.0, %v524
    %526 = vmatmul.bf16.gmra.mxu0 %v410
    %v527 = vpop.f32.mrf.mxu0
    %v528 = vadd.f32 0.0, %v527
    %v529 = vpop.f32.mrf.mxu0
    %v530 = vadd.f32 0.0, %v529
    %531 = vmatmul.bf16.gmra.mxu0 %v413
    %v532 = vpop.f32.mrf.mxu0
    %v533 = vadd.f32 0.0, %v532
    %v534 = vpop.f32.mrf.mxu0
    %v535 = vadd.f32 0.0, %v534
    %536 = vmatmul.bf16.gmra.mxu0 %v416
    %v537 = vpop.f32.mrf.mxu0
    %v538 = vadd.f32 0.0, %v537
    %v539 = vpop.f32.mrf.mxu0
    %v540 = vadd.f32 0.0, %v539
    %541 = vmatmul.bf16.gmra.mxu0 %v419
    %v542 = vpop.f32.mrf.mxu0
    %v543 = vadd.f32 0.0, %v542
    %v544 = vpop.f32.mrf.mxu0
    %v545 = vadd.f32 0.0, %v544
    %546 = vmatmul.bf16.gmra.mxu0 %v422
    %v547 = vpop.f32.mrf.mxu0
    %v548 = vadd.f32 0.0, %v547
    %v549 = vpop.f32.mrf.mxu0
    %v550 = vadd.f32 0.0, %v549
    %551 = vmatmul.bf16.gmra.mxu0 %v425
    %v552 = vpop.f32.mrf.mxu0
    %v553 = vadd.f32 0.0, %v552
    %v554 = vpop.f32.mrf.mxu0
    %v555 = vadd.f32 0.0, %v554
    %556 = vmatmul.bf16.gmra.mxu0 %v428
    %v557 = vpop.f32.mrf.mxu0
    %v558 = vadd.f32 0.0, %v557
    %v559 = vpop.f32.mrf.mxu0
    %v560 = vadd.f32 0.0, %v559
    %561 = vmatmul.bf16.gmra.mxu0 %v431
    %v562 = vpop.f32.mrf.mxu0
    %v563 = vadd.f32 0.0, %v562
    %v564 = vpop.f32.mrf.mxu0
    %v565 = vadd.f32 0.0, %v564
    %566 = vmatmul.bf16.gmra.mxu0 %v434
    %v567 = vpop.f32.mrf.mxu0
    %v568 = vadd.f32 0.0, %v567
    %v569 = vpop.f32.mrf.mxu0
    %v570 = vadd.f32 0.0, %v569
    %571 = vmatmul.bf16.gmra.mxu0 %v437
    %v572 = vpop.f32.mrf.mxu0
    %v573 = vadd.f32 0.0, %v572
    %v574 = vpop.f32.mrf.mxu0
    %v575 = vadd.f32 0.0, %v574
    %576 = vmatmul.bf16.gmra.mxu0 %v440
    %v577 = vpop.f32.mrf.mxu0
    %v578 = vadd.f32 0.0, %v577
    %v579 = vpop.f32.mrf.mxu0
    %v580 = vadd.f32 0.0, %v579
    %581 = vmatmul.bf16.gmra.mxu0 %v443
    %v582 = vpop.f32.mrf.mxu0
    %v583 = vadd.f32 0.0, %v582
    %v584 = vpop.f32.mrf.mxu0
    %v585 = vadd.f32 0.0, %v584
    %586 = vmatmul.bf16.gmra.mxu0 %v446
    %v587 = vpop.f32.mrf.mxu0
    %v588 = vadd.f32 0.0, %v587
    %v589 = vpop.f32.mrf.mxu0
    %v590 = vadd.f32 0.0, %v589
    %591 = vmatmul.bf16.gmra.mxu0 %v449
    %v592 = vpop.f32.mrf.mxu0
    %v593 = vadd.f32 0.0, %v592
    %v594 = vpop.f32.mrf.mxu0
    %v595 = vadd.f32 0.0, %v594
    %596 = vmatmul.bf16.gmra.mxu0 %v452
    %v597 = vpop.f32.mrf.mxu0
    %v598 = vadd.f32 0.0, %v597
    %v599 = vpop.f32.mrf.mxu0
    %v600 = vadd.f32 0.0, %v599
    %601 = vmatmul.bf16.gmra.mxu0 %v455
    %v602 = vpop.f32.mrf.mxu0
    %v603 = vadd.f32 0.0, %v602
    %v604 = vpop.f32.mrf.mxu0
    %v605 = vadd.f32 0.0, %v604
    %606 = vmatmul.bf16.gmra.mxu0 %v458
    %v607 = vpop.f32.mrf.mxu0
    %v608 = vadd.f32 0.0, %v607
    %v609 = vpop.f32.mrf.mxu0
    %v610 = vadd.f32 0.0, %v609
    %611 = vmatmul.bf16.gmra.mxu0 %v461
    %v612 = vpop.f32.mrf.mxu0
    %v613 = vadd.f32 0.0, %v612
    %v614 = vpop.f32.mrf.mxu0
    %v615 = vadd.f32 0.0, %v614
    %616 = vmatmul.bf16.gmra.mxu0 %v464
    %v617 = vpop.f32.mrf.mxu0
    %v618 = vadd.f32 0.0, %v617
    %v619 = vpop.f32.mrf.mxu0
    %v620 = vadd.f32 0.0, %v619
    %621 = vmatmul.bf16.gmra.mxu0 %v467
    %v622 = vpop.f32.mrf.mxu0
    %v623 = vadd.f32 0.0, %v622
    %v624 = vpop.f32.mrf.mxu0
    %v625 = vadd.f32 0.0, %v624
    %626 = vmatmul.bf16.gmra.mxu0 %v470
    %v627 = vpop.f32.mrf.mxu0
    %v628 = vadd.f32 0.0, %v627
    %v629 = vpop.f32.mrf.mxu0
    %v630 = vadd.f32 0.0, %v629
    %631 = vmatmul.bf16.gmra.mxu0 %v473
    %v632 = vpop.f32.mrf.mxu0
    %v633 = vadd.f32 0.0, %v632
    %v634 = vpop.f32.mrf.mxu0
    %v635 = vadd.f32 0.0, %v634
    %636 = vmatmul.bf16.gmra.mxu0 %v476
    %v637 = vpop.f32.mrf.mxu0
    %v638 = vadd.f32 0.0, %v637
    %v639 = vpop.f32.mrf.mxu0
    %v640 = vadd.f32 0.0, %v639
    %641 = vmatmul.bf16.gmra.mxu0 %v479
    %v642 = vpop.f32.mrf.mxu0
    %v643 = vadd.f32 0.0, %v642
    %v644 = vpop.f32.mrf.mxu0
    %v645 = vadd.f32 0.0, %v644
    %646 = vmatmul.bf16.gmra.mxu0 %v482
    %v647 = vpop.f32.mrf.mxu0
    %v648 = vadd.f32 0.0, %v647
    %v649 = vpop.f32.mrf.mxu0
    %v650 = vadd.f32 0.0, %v649
    %651 = vmatmul.bf16.gmra.mxu0 %v485
    %v652 = vpop.f32.mrf.mxu0
    %v653 = vadd.f32 0.0, %v652
    %v654 = vpop.f32.mrf.mxu0
    %v655 = vadd.f32 0.0, %v654
    %656 = vmatmul.bf16.gmra.mxu0 %v488
    %v657 = vpop.f32.mrf.mxu0
    %v658 = vadd.f32 0.0, %v657
    %v659 = vpop.f32.mrf.mxu0
    %v660 = vadd.f32 0.0, %v659
    %661 = vmatmul.bf16.gmra.mxu0 %v491
    %v662 = vpop.f32.mrf.mxu0
    %v663 = vadd.f32 0.0, %v662
    %v664 = vpop.f32.mrf.mxu0
    %v665 = vadd.f32 0.0, %v664
    %666 = vmatmul.bf16.gmra.mxu0 %v494
    %v667 = vpop.f32.mrf.mxu0
    %v668 = vadd.f32 0.0, %v667
    %v669 = vpop.f32.mrf.mxu0
    %v670 = vadd.f32 0.0, %v669
    %671 = vdwg.mxu0
    %v736 = vunpack.c.l.b16 %v109
    %v737 = vunpack.c.l.b16 %v110
    %v738 = vunpack.c.l.b16 %v111
    %v739 = vunpack.c.l.b16 %v112
    %v740 = vunpack.c.l.b16 %v113
    %v741 = vunpack.c.l.b16 %v114
    %v742 = vunpack.c.l.b16 %v115
    %v743 = vunpack.c.l.b16 %v116
    %v744 = vunpack.c.l.b16 %v117
    %v745 = vunpack.c.l.b16 %v118
    %v746 = vunpack.c.l.b16 %v119
    %v747 = vunpack.c.l.b16 %v120
    %v748 = vunpack.c.l.b16 %v121
    %v749 = vunpack.c.l.b16 %v122
    %v750 = vunpack.c.l.b16 %v123
    %v751 = vunpack.c.l.b16 %v124
    %v752 = vunpack.c.l.b16 %v125
    %v753 = vunpack.c.l.b16 %v126
    %v754 = vunpack.c.l.b16 %v127
    %v755 = vunpack.c.l.b16 %v128
    %v756 = vunpack.c.l.b16 %v129
    %v757 = vunpack.c.l.b16 %v130
    %v758 = vunpack.c.l.b16 %v131
    %v759 = vunpack.c.l.b16 %v132
    %v760 = vunpack.c.l.b16 %v133
    %v761 = vunpack.c.l.b16 %v134
    %v762 = vunpack.c.l.b16 %v135
    %v763 = vunpack.c.l.b16 %v136
    %v764 = vunpack.c.l.b16 %v137
    %v765 = vunpack.c.l.b16 %v138
    %v766 = vunpack.c.l.b16 %v139
    %v767 = vunpack.c.l.b16 %v140
    %v768 = vunpack.c.l.b16 %v141
    %v769 = vunpack.c.l.b16 %v142
    %v770 = vunpack.c.l.b16 %v143
    %v771 = vunpack.c.l.b16 %v144
    %v772 = vunpack.c.l.b16 %v145
    %v773 = vunpack.c.l.b16 %v146
    %v774 = vunpack.c.l.b16 %v147
    %v775 = vunpack.c.l.b16 %v148
    %v776 = vunpack.c.l.b16 %v149
    %v777 = vunpack.c.l.b16 %v150
    %v778 = vunpack.c.l.b16 %v151
    %v779 = vunpack.c.l.b16 %v152
    %v780 = vunpack.c.l.b16 %v153
    %v781 = vunpack.c.l.b16 %v154
    %v782 = vunpack.c.l.b16 %v155
    %v783 = vunpack.c.l.b16 %v156
    %v784 = vunpack.c.l.b16 %v157
    %v785 = vunpack.c.l.b16 %v158
    %v786 = vunpack.c.l.b16 %v159
    %v787 = vunpack.c.l.b16 %v160
    %v788 = vunpack.c.l.b16 %v161
    %v789 = vunpack.c.l.b16 %v162
    %v790 = vunpack.c.l.b16 %v163
    %v791 = vunpack.c.l.b16 %v164
    %v792 = vunpack.c.l.b16 %v165
    %v793 = vunpack.c.l.b16 %v166
    %v794 = vunpack.c.l.b16 %v167
    %v795 = vunpack.c.l.b16 %v168
    %v796 = vunpack.c.l.b16 %v169
    %v797 = vunpack.c.l.b16 %v170
    %v798 = vunpack.c.l.b16 %v171
    %v799 = vunpack.c.l.b16 %v172
    %v800 = vpack.c.b16 %v737, %v736
    %v801 = vpack.c.b16 %v739, %v738
    %v802 = vpack.c.b16 %v741, %v740
    %v803 = vpack.c.b16 %v743, %v742
    %v804 = vpack.c.b16 %v745, %v744
    %v805 = vpack.c.b16 %v747, %v746
    %v806 = vpack.c.b16 %v749, %v748
    %v807 = vpack.c.b16 %v751, %v750
    %v808 = vpack.c.b16 %v753, %v752
    %v809 = vpack.c.b16 %v755, %v754
    %v810 = vpack.c.b16 %v757, %v756
    %v811 = vpack.c.b16 %v759, %v758
    %v812 = vpack.c.b16 %v761, %v760
    %v813 = vpack.c.b16 %v763, %v762
    %v814 = vpack.c.b16 %v765, %v764
    %v815 = vpack.c.b16 %v767, %v766
    %v816 = vpack.c.b16 %v769, %v768
    %v817 = vpack.c.b16 %v771, %v770
    %v818 = vpack.c.b16 %v773, %v772
    %v819 = vpack.c.b16 %v775, %v774
    %v820 = vpack.c.b16 %v777, %v776
    %v821 = vpack.c.b16 %v779, %v778
    %v822 = vpack.c.b16 %v781, %v780
    %v823 = vpack.c.b16 %v783, %v782
    %v824 = vpack.c.b16 %v785, %v784
    %v825 = vpack.c.b16 %v787, %v786
    %v826 = vpack.c.b16 %v789, %v788
    %v827 = vpack.c.b16 %v791, %v790
    %v828 = vpack.c.b16 %v793, %v792
    %v829 = vpack.c.b16 %v795, %v794
    %v830 = vpack.c.b16 %v797, %v796
    %v831 = vpack.c.b16 %v799, %v798
    %vm832 = vcmask 31744
    %v834 = vsel %vm832, %v800, 0
    %v837 = vsel %vm832, %v801, 0
    %v840 = vsel %vm832, %v802, 0
    %v843 = vsel %vm832, %v803, 0
    %v846 = vsel %vm832, %v804, 0
    %v849 = vsel %vm832, %v805, 0
    %v852 = vsel %vm832, %v806, 0
    %v855 = vsel %vm832, %v807, 0
    %v858 = vsel %vm832, %v808, 0
    %v861 = vsel %vm832, %v809, 0
    %v864 = vsel %vm832, %v810, 0
    %v867 = vsel %vm832, %v811, 0
    %v870 = vsel %vm832, %v812, 0
    %v873 = vsel %vm832, %v813, 0
    %v876 = vsel %vm832, %v814, 0
    %v879 = vsel %vm832, %v815, 0
    %v882 = vsel %vm832, %v816, 0
    %v885 = vsel %vm832, %v817, 0
    %v888 = vsel %vm832, %v818, 0
    %v891 = vsel %vm832, %v819, 0
    %v894 = vsel %vm832, %v820, 0
    %v897 = vsel %vm832, %v821, 0
    %v900 = vsel %vm832, %v822, 0
    %v903 = vsel %vm832, %v823, 0
    %v906 = vsel %vm832, %v824, 0
    %v909 = vsel %vm832, %v825, 0
    %v912 = vsel %vm832, %v826, 0
    %v915 = vsel %vm832, %v827, 0
    %v918 = vsel %vm832, %v828, 0
    %v921 = vsel %vm832, %v829, 0
    %v924 = vsel %vm832, %v830, 0
    %v927 = vsel %vm832, %v831, 0
    %v930 = vsel %vm497, %v173, 0
    %932 = vmatpush.bf16.msra.mxu0 0
    %933 = vmatpush.bf16.msra.mxu0 0
    %934 = vmatpush.bf16.msra.mxu0 0
    %935 = vmatpush.bf16.msra.mxu0 0
    %936 = vmatpush.bf16.msra.mxu0 0
    %937 = vmatpush.bf16.msra.mxu0 0
    %938 = vmatpush.bf16.msra.mxu0 0
    %939 = vmatpush.bf16.msra.mxu0 %v930
    %940 = vmatmul.bf16.gmra.mxu0 %v834
    %v941 = vpop.f32.mrf.mxu0
    %v942 = vadd.f32 %v513, %v941
    %v943 = vpop.f32.mrf.mxu0
    %v944 = vadd.f32 %v515, %v943
    %945 = vmatmul.bf16.gmra.mxu0 %v837
    %v946 = vpop.f32.mrf.mxu0
    %v947 = vadd.f32 %v518, %v946
    %v948 = vpop.f32.mrf.mxu0
    %v949 = vadd.f32 %v520, %v948
    %950 = vmatmul.bf16.gmra.mxu0 %v840
    %v951 = vpop.f32.mrf.mxu0
    %v952 = vadd.f32 %v523, %v951
    %v953 = vpop.f32.mrf.mxu0
    %v954 = vadd.f32 %v525, %v953
    %955 = vmatmul.bf16.gmra.mxu0 %v843
    %v956 = vpop.f32.mrf.mxu0
    %v957 = vadd.f32 %v528, %v956
    %v958 = vpop.f32.mrf.mxu0
    %v959 = vadd.f32 %v530, %v958
    %960 = vmatmul.bf16.gmra.mxu0 %v846
    %v961 = vpop.f32.mrf.mxu0
    %v962 = vadd.f32 %v533, %v961
    %v963 = vpop.f32.mrf.mxu0
    %v964 = vadd.f32 %v535, %v963
    %965 = vmatmul.bf16.gmra.mxu0 %v849
    %v966 = vpop.f32.mrf.mxu0
    %v967 = vadd.f32 %v538, %v966
    %v968 = vpop.f32.mrf.mxu0
    %v969 = vadd.f32 %v540, %v968
    %970 = vmatmul.bf16.gmra.mxu0 %v852
    %v971 = vpop.f32.mrf.mxu0
    %v972 = vadd.f32 %v543, %v971
    %v973 = vpop.f32.mrf.mxu0
    %v974 = vadd.f32 %v545, %v973
    %975 = vmatmul.bf16.gmra.mxu0 %v855
    %v976 = vpop.f32.mrf.mxu0
    %v977 = vadd.f32 %v548, %v976
    %v978 = vpop.f32.mrf.mxu0
    %v979 = vadd.f32 %v550, %v978
    %980 = vmatmul.bf16.gmra.mxu0 %v858
    %v981 = vpop.f32.mrf.mxu0
    %v982 = vadd.f32 %v553, %v981
    %v983 = vpop.f32.mrf.mxu0
    %v984 = vadd.f32 %v555, %v983
    %985 = vmatmul.bf16.gmra.mxu0 %v861
    %v986 = vpop.f32.mrf.mxu0
    %v987 = vadd.f32 %v558, %v986
    %v988 = vpop.f32.mrf.mxu0
    %v989 = vadd.f32 %v560, %v988
    %990 = vmatmul.bf16.gmra.mxu0 %v864
    %v991 = vpop.f32.mrf.mxu0
    %v992 = vadd.f32 %v563, %v991
    %v993 = vpop.f32.mrf.mxu0
    %v994 = vadd.f32 %v565, %v993
    %995 = vmatmul.bf16.gmra.mxu0 %v867
    %v996 = vpop.f32.mrf.mxu0
    %v997 = vadd.f32 %v568, %v996
    %v998 = vpop.f32.mrf.mxu0
    %v999 = vadd.f32 %v570, %v998
    %1000 = vmatmul.bf16.gmra.mxu0 %v870
    %v1001 = vpop.f32.mrf.mxu0
    %v1002 = vadd.f32 %v573, %v1001
    %v1003 = vpop.f32.mrf.mxu0
    %v1004 = vadd.f32 %v575, %v1003
    %1005 = vmatmul.bf16.gmra.mxu0 %v873
    %v1006 = vpop.f32.mrf.mxu0
    %v1007 = vadd.f32 %v578, %v1006
    %v1008 = vpop.f32.mrf.mxu0
    %v1009 = vadd.f32 %v580, %v1008
    %1010 = vmatmul.bf16.gmra.mxu0 %v876
    %v1011 = vpop.f32.mrf.mxu0
    %v1012 = vadd.f32 %v583, %v1011
    %v1013 = vpop.f32.mrf.mxu0
    %v1014 = vadd.f32 %v585, %v1013
    %1015 = vmatmul.bf16.gmra.mxu0 %v879
    %v1016 = vpop.f32.mrf.mxu0
    %v1017 = vadd.f32 %v588, %v1016
    %v1018 = vpop.f32.mrf.mxu0
    %v1019 = vadd.f32 %v590, %v1018
    %1020 = vmatmul.bf16.gmra.mxu0 %v882
    %v1021 = vpop.f32.mrf.mxu0
    %v1022 = vadd.f32 %v593, %v1021
    %v1023 = vpop.f32.mrf.mxu0
    %v1024 = vadd.f32 %v595, %v1023
    %1025 = vmatmul.bf16.gmra.mxu0 %v885
    %v1026 = vpop.f32.mrf.mxu0
    %v1027 = vadd.f32 %v598, %v1026
    %v1028 = vpop.f32.mrf.mxu0
    %v1029 = vadd.f32 %v600, %v1028
    %1030 = vmatmul.bf16.gmra.mxu0 %v888
    %v1031 = vpop.f32.mrf.mxu0
    %v1032 = vadd.f32 %v603, %v1031
    %v1033 = vpop.f32.mrf.mxu0
    %v1034 = vadd.f32 %v605, %v1033
    %1035 = vmatmul.bf16.gmra.mxu0 %v891
    %v1036 = vpop.f32.mrf.mxu0
    %v1037 = vadd.f32 %v608, %v1036
    %v1038 = vpop.f32.mrf.mxu0
    %v1039 = vadd.f32 %v610, %v1038
    %1040 = vmatmul.bf16.gmra.mxu0 %v894
    %v1041 = vpop.f32.mrf.mxu0
    %v1042 = vadd.f32 %v613, %v1041
    %v1043 = vpop.f32.mrf.mxu0
    %v1044 = vadd.f32 %v615, %v1043
    %1045 = vmatmul.bf16.gmra.mxu0 %v897
    %v1046 = vpop.f32.mrf.mxu0
    %v1047 = vadd.f32 %v618, %v1046
    %v1048 = vpop.f32.mrf.mxu0
    %v1049 = vadd.f32 %v620, %v1048
    %1050 = vmatmul.bf16.gmra.mxu0 %v900
    %v1051 = vpop.f32.mrf.mxu0
    %v1052 = vadd.f32 %v623, %v1051
    %v1053 = vpop.f32.mrf.mxu0
    %v1054 = vadd.f32 %v625, %v1053
    %1055 = vmatmul.bf16.gmra.mxu0 %v903
    %v1056 = vpop.f32.mrf.mxu0
    %v1057 = vadd.f32 %v628, %v1056
    %v1058 = vpop.f32.mrf.mxu0
    %v1059 = vadd.f32 %v630, %v1058
    %1060 = vmatmul.bf16.gmra.mxu0 %v906
    %v1061 = vpop.f32.mrf.mxu0
    %v1062 = vadd.f32 %v633, %v1061
    %v1063 = vpop.f32.mrf.mxu0
    %v1064 = vadd.f32 %v635, %v1063
    %1065 = vmatmul.bf16.gmra.mxu0 %v909
    %v1066 = vpop.f32.mrf.mxu0
    %v1067 = vadd.f32 %v638, %v1066
    %v1068 = vpop.f32.mrf.mxu0
    %v1069 = vadd.f32 %v640, %v1068
    %1070 = vmatmul.bf16.gmra.mxu0 %v912
    %v1071 = vpop.f32.mrf.mxu0
    %v1072 = vadd.f32 %v643, %v1071
    %v1073 = vpop.f32.mrf.mxu0
    %v1074 = vadd.f32 %v645, %v1073
    %1075 = vmatmul.bf16.gmra.mxu0 %v915
    %v1076 = vpop.f32.mrf.mxu0
    %v1077 = vadd.f32 %v648, %v1076
    %v1078 = vpop.f32.mrf.mxu0
    %v1079 = vadd.f32 %v650, %v1078
    %1080 = vmatmul.bf16.gmra.mxu0 %v918
    %v1081 = vpop.f32.mrf.mxu0
    %v1082 = vadd.f32 %v653, %v1081
    %v1083 = vpop.f32.mrf.mxu0
    %v1084 = vadd.f32 %v655, %v1083
    %1085 = vmatmul.bf16.gmra.mxu0 %v921
    %v1086 = vpop.f32.mrf.mxu0
    %v1087 = vadd.f32 %v658, %v1086
    %v1088 = vpop.f32.mrf.mxu0
    %v1089 = vadd.f32 %v660, %v1088
    %1090 = vmatmul.bf16.gmra.mxu0 %v924
    %v1091 = vpop.f32.mrf.mxu0
    %v1092 = vadd.f32 %v663, %v1091
    %v1093 = vpop.f32.mrf.mxu0
    %v1094 = vadd.f32 %v665, %v1093
    %1095 = vmatmul.bf16.gmra.mxu0 %v927
    %v1096 = vpop.f32.mrf.mxu0
    %v1097 = vadd.f32 %v668, %v1096
    %v1098 = vpop.f32.mrf.mxu0
    %v1099 = vadd.f32 %v670, %v1098
    %1100 = vdwg.mxu0
    %v1101 = vld [vmem:[%s5] sm:$0x1]
    %v1103 = vperm.slane %v1101, 0
    %v1105 = vadd.f32 %v942, %v1103
    %v1106 = vadd.f32 %v944, %v1103
    %v1107 = vadd.f32 %v947, %v1103
    %v1108 = vadd.f32 %v949, %v1103
    %v1109 = vadd.f32 %v952, %v1103
    %v1110 = vadd.f32 %v954, %v1103
    %v1111 = vadd.f32 %v957, %v1103
    %v1112 = vadd.f32 %v959, %v1103
    %v1113 = vadd.f32 %v962, %v1103
    %v1114 = vadd.f32 %v964, %v1103
    %v1115 = vadd.f32 %v967, %v1103
    %v1116 = vadd.f32 %v969, %v1103
    %v1117 = vadd.f32 %v972, %v1103
    %v1118 = vadd.f32 %v974, %v1103
    %v1119 = vadd.f32 %v977, %v1103
    %v1120 = vadd.f32 %v979, %v1103
    %v1121 = vadd.f32 %v982, %v1103
    %v1122 = vadd.f32 %v984, %v1103
    %v1123 = vadd.f32 %v987, %v1103
    %v1124 = vadd.f32 %v989, %v1103
    %v1125 = vadd.f32 %v992, %v1103
    %v1126 = vadd.f32 %v994, %v1103
    %v1127 = vadd.f32 %v997, %v1103
    %v1128 = vadd.f32 %v999, %v1103
    %v1129 = vadd.f32 %v1002, %v1103
    %v1130 = vadd.f32 %v1004, %v1103
    %v1131 = vadd.f32 %v1007, %v1103
    %v1132 = vadd.f32 %v1009, %v1103
    %v1133 = vadd.f32 %v1012, %v1103
    %v1134 = vadd.f32 %v1014, %v1103
    %v1135 = vadd.f32 %v1017, %v1103
    %v1136 = vadd.f32 %v1019, %v1103
    %v1137 = vadd.f32 %v1022, %v1103
    %v1138 = vadd.f32 %v1024, %v1103
    %v1139 = vadd.f32 %v1027, %v1103
    %v1140 = vadd.f32 %v1029, %v1103
    %v1141 = vadd.f32 %v1032, %v1103
    %v1142 = vadd.f32 %v1034, %v1103
    %v1143 = vadd.f32 %v1037, %v1103
    %v1144 = vadd.f32 %v1039, %v1103
    %v1145 = vadd.f32 %v1042, %v1103
    %v1146 = vadd.f32 %v1044, %v1103
    %v1147 = vadd.f32 %v1047, %v1103
    %v1148 = vadd.f32 %v1049, %v1103
    %v1149 = vadd.f32 %v1052, %v1103
    %v1150 = vadd.f32 %v1054, %v1103
    %v1151 = vadd.f32 %v1057, %v1103
    %v1152 = vadd.f32 %v1059, %v1103
    %v1153 = vadd.f32 %v1062, %v1103
    %v1154 = vadd.f32 %v1064, %v1103
    %v1155 = vadd.f32 %v1067, %v1103
    %v1156 = vadd.f32 %v1069, %v1103
    %v1157 = vadd.f32 %v1072, %v1103
    %v1158 = vadd.f32 %v1074, %v1103
    %v1159 = vadd.f32 %v1077, %v1103
    %v1160 = vadd.f32 %v1079, %v1103
    %v1161 = vadd.f32 %v1082, %v1103
    %v1162 = vadd.f32 %v1084, %v1103
    %v1163 = vadd.f32 %v1087, %v1103
    %v1164 = vadd.f32 %v1089, %v1103
    %v1165 = vadd.f32 %v1092, %v1103
    %v1166 = vadd.f32 %v1094, %v1103
    %v1167 = vadd.f32 %v1097, %v1103
    %v1168 = vadd.f32 %v1099, %v1103
    %v1169 = vmax.f32 %v1105, 0.0
    %v1170 = vmax.f32 %v1106, 0.0
    %v1171 = vmax.f32 %v1107, 0.0
    %v1172 = vmax.f32 %v1108, 0.0
    %v1173 = vmax.f32 %v1109, 0.0
    %v1174 = vmax.f32 %v1110, 0.0
    %v1175 = vmax.f32 %v1111, 0.0
    %v1176 = vmax.f32 %v1112, 0.0
    %v1177 = vmax.f32 %v1113, 0.0
    %v1178 = vmax.f32 %v1114, 0.0
    %v1179 = vmax.f32 %v1115, 0.0
    %v1180 = vmax.f32 %v1116, 0.0
    %v1181 = vmax.f32 %v1117, 0.0
    %v1182 = vmax.f32 %v1118, 0.0
    %v1183 = vmax.f32 %v1119, 0.0
    %v1184 = vmax.f32 %v1120, 0.0
    %v1185 = vmax.f32 %v1121, 0.0
    %v1186 = vmax.f32 %v1122, 0.0
    %v1187 = vmax.f32 %v1123, 0.0
    %v1188 = vmax.f32 %v1124, 0.0
    %v1189 = vmax.f32 %v1125, 0.0
    %v1190 = vmax.f32 %v1126, 0.0
    %v1191 = vmax.f32 %v1127, 0.0
    %v1192 = vmax.f32 %v1128, 0.0
    %v1193 = vmax.f32 %v1129, 0.0
    %v1194 = vmax.f32 %v1130, 0.0
    %v1195 = vmax.f32 %v1131, 0.0
    %v1196 = vmax.f32 %v1132, 0.0
    %v1197 = vmax.f32 %v1133, 0.0
    %v1198 = vmax.f32 %v1134, 0.0
    %v1199 = vmax.f32 %v1135, 0.0
    %v1200 = vmax.f32 %v1136, 0.0
    %v1201 = vmax.f32 %v1137, 0.0
    %v1202 = vmax.f32 %v1138, 0.0
    %v1203 = vmax.f32 %v1139, 0.0
    %v1204 = vmax.f32 %v1140, 0.0
    %v1205 = vmax.f32 %v1141, 0.0
    %v1206 = vmax.f32 %v1142, 0.0
    %v1207 = vmax.f32 %v1143, 0.0
    %v1208 = vmax.f32 %v1144, 0.0
    %v1209 = vmax.f32 %v1145, 0.0
    %v1210 = vmax.f32 %v1146, 0.0
    %v1211 = vmax.f32 %v1147, 0.0
    %v1212 = vmax.f32 %v1148, 0.0
    %v1213 = vmax.f32 %v1149, 0.0
    %v1214 = vmax.f32 %v1150, 0.0
    %v1215 = vmax.f32 %v1151, 0.0
    %v1216 = vmax.f32 %v1152, 0.0
    %v1217 = vmax.f32 %v1153, 0.0
    %v1218 = vmax.f32 %v1154, 0.0
    %v1219 = vmax.f32 %v1155, 0.0
    %v1220 = vmax.f32 %v1156, 0.0
    %v1221 = vmax.f32 %v1157, 0.0
    %v1222 = vmax.f32 %v1158, 0.0
    %v1223 = vmax.f32 %v1159, 0.0
    %v1224 = vmax.f32 %v1160, 0.0
    %v1225 = vmax.f32 %v1161, 0.0
    %v1226 = vmax.f32 %v1162, 0.0
    %v1227 = vmax.f32 %v1163, 0.0
    %v1228 = vmax.f32 %v1164, 0.0
    %v1229 = vmax.f32 %v1165, 0.0
    %v1230 = vmax.f32 %v1166, 0.0
    %v1231 = vmax.f32 %v1167, 0.0
    %v1232 = vmax.f32 %v1168, 0.0
    %v1233 = vpack.c.bf16 %v1170, %v1169
    %v1234 = vpack.c.bf16 %v1172, %v1171
    %v1235 = vpack.c.bf16 %v1174, %v1173
    %v1236 = vpack.c.bf16 %v1176, %v1175
    %v1237 = vpack.c.bf16 %v1178, %v1177
    %v1238 = vpack.c.bf16 %v1180, %v1179
    %v1239 = vpack.c.bf16 %v1182, %v1181
    %v1240 = vpack.c.bf16 %v1184, %v1183
    %v1241 = vpack.c.bf16 %v1186, %v1185
    %v1242 = vpack.c.bf16 %v1188, %v1187
    %v1243 = vpack.c.bf16 %v1190, %v1189
    %v1244 = vpack.c.bf16 %v1192, %v1191
    %v1245 = vpack.c.bf16 %v1194, %v1193
    %v1246 = vpack.c.bf16 %v1196, %v1195
    %v1247 = vpack.c.bf16 %v1198, %v1197
    %v1248 = vpack.c.bf16 %v1200, %v1199
    %v1249 = vpack.c.bf16 %v1202, %v1201
    %v1250 = vpack.c.bf16 %v1204, %v1203
    %v1251 = vpack.c.bf16 %v1206, %v1205
    %v1252 = vpack.c.bf16 %v1208, %v1207
    %v1253 = vpack.c.bf16 %v1210, %v1209
    %v1254 = vpack.c.bf16 %v1212, %v1211
    %v1255 = vpack.c.bf16 %v1214, %v1213
    %v1256 = vpack.c.bf16 %v1216, %v1215
    %v1257 = vpack.c.bf16 %v1218, %v1217
    %v1258 = vpack.c.bf16 %v1220, %v1219
    %v1259 = vpack.c.bf16 %v1222, %v1221
    %v1260 = vpack.c.bf16 %v1224, %v1223
    %v1261 = vpack.c.bf16 %v1226, %v1225
    %v1262 = vpack.c.bf16 %v1228, %v1227
    %v1263 = vpack.c.bf16 %v1230, %v1229
    %v1264 = vpack.c.bf16 %v1232, %v1231
    %v1265 = vld [vmem:[%s6] sm:$0xf]
    %v1266 = vld [vmem:[%s6 + $0x4] sm:$0xf]
    %v1267 = vld [vmem:[%s6 + $0x8] sm:$0xf]
    %v1268 = vld [vmem:[%s6 + $0xc] sm:$0xf]
    %v1269 = vld [vmem:[%s7] sm:$0x1]
    %v1271 = vperm.slane %v1269, 0
    %v1277 = vunpack.c.l.b16 %v1265
    %v1278 = vunpack.c.l.b16 %v1266
    %v1279 = vunpack.c.l.b16 %v1267
    %v1280 = vunpack.c.l.b16 %v1268
    %v1281 = vpack.c.b16 %v1278, %v1277
    %v1282 = vpack.c.b16 %v1280, %v1279
    %vm1285 = vcmask 261120
    %v1287 = vsel %vm1285, %v1233, 0
    %v1290 = vsel %vm1285, %v1234, 0
    %v1293 = vsel %vm1285, %v1235, 0
    %v1296 = vsel %vm1285, %v1236, 0
    %v1299 = vsel %vm1285, %v1237, 0
    %v1302 = vsel %vm1285, %v1238, 0
    %v1305 = vsel %vm1285, %v1239, 0
    %v1308 = vsel %vm1285, %v1240, 0
    %v1311 = vsel %vm1285, %v1241, 0
    %v1314 = vsel %vm1285, %v1242, 0
    %v1317 = vsel %vm1285, %v1243, 0
    %v1320 = vsel %vm1285, %v1244, 0
    %v1323 = vsel %vm1285, %v1245, 0
    %v1326 = vsel %vm1285, %v1246, 0
    %v1329 = vsel %vm1285, %v1247, 0
    %v1332 = vsel %vm1285, %v1248, 0
    %v1335 = vsel %vm1285, %v1249, 0
    %v1338 = vsel %vm1285, %v1250, 0
    %v1341 = vsel %vm1285, %v1251, 0
    %v1344 = vsel %vm1285, %v1252, 0
    %v1347 = vsel %vm1285, %v1253, 0
    %v1350 = vsel %vm1285, %v1254, 0
    %v1353 = vsel %vm1285, %v1255, 0
    %v1356 = vsel %vm1285, %v1256, 0
    %v1359 = vsel %vm1285, %v1257, 0
    %v1362 = vsel %vm1285, %v1258, 0
    %v1365 = vsel %vm1285, %v1259, 0
    %v1368 = vsel %vm1285, %v1260, 0
    %v1371 = vsel %vm1285, %v1261, 0
    %v1374 = vsel %vm1285, %v1262, 0
    %v1377 = vsel %vm1285, %v1263, 0
    %v1380 = vsel %vm1285, %v1264, 0
    %1382 = vmatpush.bf16.msra.mxu0 0
    %1383 = vmatpush.bf16.msra.mxu0 0
    %1384 = vmatpush.bf16.msra.mxu0 0
    %1385 = vmatpush.bf16.msra.mxu0 0
    %1386 = vmatpush.bf16.msra.mxu0 0
    %1387 = vmatpush.bf16.msra.mxu0 0
    %1388 = vmatpush.bf16.msra.mxu0 %v1282
    %1389 = vmatpush.bf16.msra.mxu0 %v1281
    %1390 = vmatmul.bf16.gmra.mxu0 %v1287
    %v1391 = vpop.f32.mrf.mxu0
    %v1392 = vadd.f32 %v1271, %v1391
    %v1393 = vpop.f32.mrf.mxu0
    %v1394 = vadd.f32 %v1271, %v1393
    %1395 = vmatmul.bf16.gmra.mxu0 %v1290
    %v1396 = vpop.f32.mrf.mxu0
    %v1397 = vadd.f32 %v1271, %v1396
    %v1398 = vpop.f32.mrf.mxu0
    %v1399 = vadd.f32 %v1271, %v1398
    %1400 = vmatmul.bf16.gmra.mxu0 %v1293
    %v1401 = vpop.f32.mrf.mxu0
    %v1402 = vadd.f32 %v1271, %v1401
    %v1403 = vpop.f32.mrf.mxu0
    %v1404 = vadd.f32 %v1271, %v1403
    %1405 = vmatmul.bf16.gmra.mxu0 %v1296
    %v1406 = vpop.f32.mrf.mxu0
    %v1407 = vadd.f32 %v1271, %v1406
    %v1408 = vpop.f32.mrf.mxu0
    %v1409 = vadd.f32 %v1271, %v1408
    %1410 = vmatmul.bf16.gmra.mxu0 %v1299
    %v1411 = vpop.f32.mrf.mxu0
    %v1412 = vadd.f32 %v1271, %v1411
    %v1413 = vpop.f32.mrf.mxu0
    %v1414 = vadd.f32 %v1271, %v1413
    %1415 = vmatmul.bf16.gmra.mxu0 %v1302
    %v1416 = vpop.f32.mrf.mxu0
    %v1417 = vadd.f32 %v1271, %v1416
    %v1418 = vpop.f32.mrf.mxu0
    %v1419 = vadd.f32 %v1271, %v1418
    %1420 = vmatmul.bf16.gmra.mxu0 %v1305
    %v1421 = vpop.f32.mrf.mxu0
    %v1422 = vadd.f32 %v1271, %v1421
    %v1423 = vpop.f32.mrf.mxu0
    %v1424 = vadd.f32 %v1271, %v1423
    %1425 = vmatmul.bf16.gmra.mxu0 %v1308
    %v1426 = vpop.f32.mrf.mxu0
    %v1427 = vadd.f32 %v1271, %v1426
    %v1428 = vpop.f32.mrf.mxu0
    %v1429 = vadd.f32 %v1271, %v1428
    %1430 = vmatmul.bf16.gmra.mxu0 %v1311
    %v1431 = vpop.f32.mrf.mxu0
    %v1432 = vadd.f32 %v1271, %v1431
    %v1433 = vpop.f32.mrf.mxu0
    %v1434 = vadd.f32 %v1271, %v1433
    %1435 = vmatmul.bf16.gmra.mxu0 %v1314
    %v1436 = vpop.f32.mrf.mxu0
    %v1437 = vadd.f32 %v1271, %v1436
    %v1438 = vpop.f32.mrf.mxu0
    %v1439 = vadd.f32 %v1271, %v1438
    %1440 = vmatmul.bf16.gmra.mxu0 %v1317
    %v1441 = vpop.f32.mrf.mxu0
    %v1442 = vadd.f32 %v1271, %v1441
    %v1443 = vpop.f32.mrf.mxu0
    %v1444 = vadd.f32 %v1271, %v1443
    %1445 = vmatmul.bf16.gmra.mxu0 %v1320
    %v1446 = vpop.f32.mrf.mxu0
    %v1447 = vadd.f32 %v1271, %v1446
    %v1448 = vpop.f32.mrf.mxu0
    %v1449 = vadd.f32 %v1271, %v1448
    %1450 = vmatmul.bf16.gmra.mxu0 %v1323
    %v1451 = vpop.f32.mrf.mxu0
    %v1452 = vadd.f32 %v1271, %v1451
    %v1453 = vpop.f32.mrf.mxu0
    %v1454 = vadd.f32 %v1271, %v1453
    %1455 = vmatmul.bf16.gmra.mxu0 %v1326
    %v1456 = vpop.f32.mrf.mxu0
    %v1457 = vadd.f32 %v1271, %v1456
    %v1458 = vpop.f32.mrf.mxu0
    %v1459 = vadd.f32 %v1271, %v1458
    %1460 = vmatmul.bf16.gmra.mxu0 %v1329
    %v1461 = vpop.f32.mrf.mxu0
    %v1462 = vadd.f32 %v1271, %v1461
    %v1463 = vpop.f32.mrf.mxu0
    %v1464 = vadd.f32 %v1271, %v1463
    %1465 = vmatmul.bf16.gmra.mxu0 %v1332
    %v1466 = vpop.f32.mrf.mxu0
    %v1467 = vadd.f32 %v1271, %v1466
    %v1468 = vpop.f32.mrf.mxu0
    %v1469 = vadd.f32 %v1271, %v1468
    %1470 = vmatmul.bf16.gmra.mxu0 %v1335
    %v1471 = vpop.f32.mrf.mxu0
    %v1472 = vadd.f32 %v1271, %v1471
    %v1473 = vpop.f32.mrf.mxu0
    %v1474 = vadd.f32 %v1271, %v1473
    %1475 = vmatmul.bf16.gmra.mxu0 %v1338
    %v1476 = vpop.f32.mrf.mxu0
    %v1477 = vadd.f32 %v1271, %v1476
    %v1478 = vpop.f32.mrf.mxu0
    %v1479 = vadd.f32 %v1271, %v1478
    %1480 = vmatmul.bf16.gmra.mxu0 %v1341
    %v1481 = vpop.f32.mrf.mxu0
    %v1482 = vadd.f32 %v1271, %v1481
    %v1483 = vpop.f32.mrf.mxu0
    %v1484 = vadd.f32 %v1271, %v1483
    %1485 = vmatmul.bf16.gmra.mxu0 %v1344
    %v1486 = vpop.f32.mrf.mxu0
    %v1487 = vadd.f32 %v1271, %v1486
    %v1488 = vpop.f32.mrf.mxu0
    %v1489 = vadd.f32 %v1271, %v1488
    %1490 = vmatmul.bf16.gmra.mxu0 %v1347
    %v1491 = vpop.f32.mrf.mxu0
    %v1492 = vadd.f32 %v1271, %v1491
    %v1493 = vpop.f32.mrf.mxu0
    %v1494 = vadd.f32 %v1271, %v1493
    %1495 = vmatmul.bf16.gmra.mxu0 %v1350
    %v1496 = vpop.f32.mrf.mxu0
    %v1497 = vadd.f32 %v1271, %v1496
    %v1498 = vpop.f32.mrf.mxu0
    %v1499 = vadd.f32 %v1271, %v1498
    %1500 = vmatmul.bf16.gmra.mxu0 %v1353
    %v1501 = vpop.f32.mrf.mxu0
    %v1502 = vadd.f32 %v1271, %v1501
    %v1503 = vpop.f32.mrf.mxu0
    %v1504 = vadd.f32 %v1271, %v1503
    %1505 = vmatmul.bf16.gmra.mxu0 %v1356
    %v1506 = vpop.f32.mrf.mxu0
    %v1507 = vadd.f32 %v1271, %v1506
    %v1508 = vpop.f32.mrf.mxu0
    %v1509 = vadd.f32 %v1271, %v1508
    %1510 = vmatmul.bf16.gmra.mxu0 %v1359
    %v1511 = vpop.f32.mrf.mxu0
    %v1512 = vadd.f32 %v1271, %v1511
    %v1513 = vpop.f32.mrf.mxu0
    %v1514 = vadd.f32 %v1271, %v1513
    %1515 = vmatmul.bf16.gmra.mxu0 %v1362
    %v1516 = vpop.f32.mrf.mxu0
    %v1517 = vadd.f32 %v1271, %v1516
    %v1518 = vpop.f32.mrf.mxu0
    %v1519 = vadd.f32 %v1271, %v1518
    %1520 = vmatmul.bf16.gmra.mxu0 %v1365
    %v1521 = vpop.f32.mrf.mxu0
    %v1522 = vadd.f32 %v1271, %v1521
    %v1523 = vpop.f32.mrf.mxu0
    %v1524 = vadd.f32 %v1271, %v1523
    %1525 = vmatmul.bf16.gmra.mxu0 %v1368
    %v1526 = vpop.f32.mrf.mxu0
    %v1527 = vadd.f32 %v1271, %v1526
    %v1528 = vpop.f32.mrf.mxu0
    %v1529 = vadd.f32 %v1271, %v1528
    %1530 = vmatmul.bf16.gmra.mxu0 %v1371
    %v1531 = vpop.f32.mrf.mxu0
    %v1532 = vadd.f32 %v1271, %v1531
    %v1533 = vpop.f32.mrf.mxu0
    %v1534 = vadd.f32 %v1271, %v1533
    %1535 = vmatmul.bf16.gmra.mxu0 %v1374
    %v1536 = vpop.f32.mrf.mxu0
    %v1537 = vadd.f32 %v1271, %v1536
    %v1538 = vpop.f32.mrf.mxu0
    %v1539 = vadd.f32 %v1271, %v1538
    %1540 = vmatmul.bf16.gmra.mxu0 %v1377
    %v1541 = vpop.f32.mrf.mxu0
    %v1542 = vadd.f32 %v1271, %v1541
    %v1543 = vpop.f32.mrf.mxu0
    %v1544 = vadd.f32 %v1271, %v1543
    %1545 = vmatmul.bf16.gmra.mxu0 %v1380
    %v1546 = vpop.f32.mrf.mxu0
    %v1547 = vadd.f32 %v1271, %v1546
    %v1548 = vpop.f32.mrf.mxu0
    %v1549 = vadd.f32 %v1271, %v1548
    %1550 = vdwg.mxu0
    %v1551 = vmax.f32 %v1392, 0.0
    %v1552 = vmax.f32 %v1394, 0.0
    %v1553 = vmax.f32 %v1397, 0.0
    %v1554 = vmax.f32 %v1399, 0.0
    %v1555 = vmax.f32 %v1402, 0.0
    %v1556 = vmax.f32 %v1404, 0.0
    %v1557 = vmax.f32 %v1407, 0.0
    %v1558 = vmax.f32 %v1409, 0.0
    %v1559 = vmax.f32 %v1412, 0.0
    %v1560 = vmax.f32 %v1414, 0.0
    %v1561 = vmax.f32 %v1417, 0.0
    %v1562 = vmax.f32 %v1419, 0.0
    %v1563 = vmax.f32 %v1422, 0.0
    %v1564 = vmax.f32 %v1424, 0.0
    %v1565 = vmax.f32 %v1427, 0.0
    %v1566 = vmax.f32 %v1429, 0.0
    %v1567 = vmax.f32 %v1432, 0.0
    %v1568 = vmax.f32 %v1434, 0.0
    %v1569 = vmax.f32 %v1437, 0.0
    %v1570 = vmax.f32 %v1439, 0.0
    %v1571 = vmax.f32 %v1442, 0.0
    %v1572 = vmax.f32 %v1444, 0.0
    %v1573 = vmax.f32 %v1447, 0.0
    %v1574 = vmax.f32 %v1449, 0.0
    %v1575 = vmax.f32 %v1452, 0.0
    %v1576 = vmax.f32 %v1454, 0.0
    %v1577 = vmax.f32 %v1457, 0.0
    %v1578 = vmax.f32 %v1459, 0.0
    %v1579 = vmax.f32 %v1462, 0.0
    %v1580 = vmax.f32 %v1464, 0.0
    %v1581 = vmax.f32 %v1467, 0.0
    %v1582 = vmax.f32 %v1469, 0.0
    %v1583 = vmax.f32 %v1472, 0.0
    %v1584 = vmax.f32 %v1474, 0.0
    %v1585 = vmax.f32 %v1477, 0.0
    %v1586 = vmax.f32 %v1479, 0.0
    %v1587 = vmax.f32 %v1482, 0.0
    %v1588 = vmax.f32 %v1484, 0.0
    %v1589 = vmax.f32 %v1487, 0.0
    %v1590 = vmax.f32 %v1489, 0.0
    %v1591 = vmax.f32 %v1492, 0.0
    %v1592 = vmax.f32 %v1494, 0.0
    %v1593 = vmax.f32 %v1497, 0.0
    %v1594 = vmax.f32 %v1499, 0.0
    %v1595 = vmax.f32 %v1502, 0.0
    %v1596 = vmax.f32 %v1504, 0.0
    %v1597 = vmax.f32 %v1507, 0.0
    %v1598 = vmax.f32 %v1509, 0.0
    %v1599 = vmax.f32 %v1512, 0.0
    %v1600 = vmax.f32 %v1514, 0.0
    %v1601 = vmax.f32 %v1517, 0.0
    %v1602 = vmax.f32 %v1519, 0.0
    %v1603 = vmax.f32 %v1522, 0.0
    %v1604 = vmax.f32 %v1524, 0.0
    %v1605 = vmax.f32 %v1527, 0.0
    %v1606 = vmax.f32 %v1529, 0.0
    %v1607 = vmax.f32 %v1532, 0.0
    %v1608 = vmax.f32 %v1534, 0.0
    %v1609 = vmax.f32 %v1537, 0.0
    %v1610 = vmax.f32 %v1539, 0.0
    %v1611 = vmax.f32 %v1542, 0.0
    %v1612 = vmax.f32 %v1544, 0.0
    %v1613 = vmax.f32 %v1547, 0.0
    %v1614 = vmax.f32 %v1549, 0.0
    %v1615 = vpack.c.bf16 %v1552, %v1551
    %v1616 = vpack.c.bf16 %v1554, %v1553
    %v1617 = vpack.c.bf16 %v1556, %v1555
    %v1618 = vpack.c.bf16 %v1558, %v1557
    %v1619 = vpack.c.bf16 %v1560, %v1559
    %v1620 = vpack.c.bf16 %v1562, %v1561
    %v1621 = vpack.c.bf16 %v1564, %v1563
    %v1622 = vpack.c.bf16 %v1566, %v1565
    %v1623 = vpack.c.bf16 %v1568, %v1567
    %v1624 = vpack.c.bf16 %v1570, %v1569
    %v1625 = vpack.c.bf16 %v1572, %v1571
    %v1626 = vpack.c.bf16 %v1574, %v1573
    %v1627 = vpack.c.bf16 %v1576, %v1575
    %v1628 = vpack.c.bf16 %v1578, %v1577
    %v1629 = vpack.c.bf16 %v1580, %v1579
    %v1630 = vpack.c.bf16 %v1582, %v1581
    %v1631 = vpack.c.bf16 %v1584, %v1583
    %v1632 = vpack.c.bf16 %v1586, %v1585
    %v1633 = vpack.c.bf16 %v1588, %v1587
    %v1634 = vpack.c.bf16 %v1590, %v1589
    %v1635 = vpack.c.bf16 %v1592, %v1591
    %v1636 = vpack.c.bf16 %v1594, %v1593
    %v1637 = vpack.c.bf16 %v1596, %v1595
    %v1638 = vpack.c.bf16 %v1598, %v1597
    %v1639 = vpack.c.bf16 %v1600, %v1599
    %v1640 = vpack.c.bf16 %v1602, %v1601
    %v1641 = vpack.c.bf16 %v1604, %v1603
    %v1642 = vpack.c.bf16 %v1606, %v1605
    %v1643 = vpack.c.bf16 %v1608, %v1607
    %v1644 = vpack.c.bf16 %v1610, %v1609
    %v1645 = vpack.c.bf16 %v1612, %v1611
    %v1646 = vpack.c.bf16 %v1614, %v1613
    %v1647 = vld [vmem:[%s8] sm:$0xf]
    %v1648 = vld [vmem:[%s8 + $0x4] sm:$0xf]
    %v1649 = vld [vmem:[%s8 + $0x8] sm:$0xf]
    %v1650 = vld [vmem:[%s8 + $0xc] sm:$0xf]
    %v1651 = vld [vmem:[%s9] sm:$0x1]
    %v1653 = vperm.slane %v1651, 0
    %v1659 = vunpack.c.l.b16 %v1647
    %v1660 = vunpack.c.l.b16 %v1648
    %v1661 = vunpack.c.l.b16 %v1649
    %v1662 = vunpack.c.l.b16 %v1650
    %v1663 = vpack.c.b16 %v1660, %v1659
    %v1664 = vpack.c.b16 %v1662, %v1661
    %v1668 = vsel %vm1285, %v1615, 0
    %v1671 = vsel %vm1285, %v1616, 0
    %v1674 = vsel %vm1285, %v1617, 0
    %v1677 = vsel %vm1285, %v1618, 0
    %v1680 = vsel %vm1285, %v1619, 0
    %v1683 = vsel %vm1285, %v1620, 0
    %v1686 = vsel %vm1285, %v1621, 0
    %v1689 = vsel %vm1285, %v1622, 0
    %v1692 = vsel %vm1285, %v1623, 0
    %v1695 = vsel %vm1285, %v1624, 0
    %v1698 = vsel %vm1285, %v1625, 0
    %v1701 = vsel %vm1285, %v1626, 0
    %v1704 = vsel %vm1285, %v1627, 0
    %v1707 = vsel %vm1285, %v1628, 0
    %v1710 = vsel %vm1285, %v1629, 0
    %v1713 = vsel %vm1285, %v1630, 0
    %v1716 = vsel %vm1285, %v1631, 0
    %v1719 = vsel %vm1285, %v1632, 0
    %v1722 = vsel %vm1285, %v1633, 0
    %v1725 = vsel %vm1285, %v1634, 0
    %v1728 = vsel %vm1285, %v1635, 0
    %v1731 = vsel %vm1285, %v1636, 0
    %v1734 = vsel %vm1285, %v1637, 0
    %v1737 = vsel %vm1285, %v1638, 0
    %v1740 = vsel %vm1285, %v1639, 0
    %v1743 = vsel %vm1285, %v1640, 0
    %v1746 = vsel %vm1285, %v1641, 0
    %v1749 = vsel %vm1285, %v1642, 0
    %v1752 = vsel %vm1285, %v1643, 0
    %v1755 = vsel %vm1285, %v1644, 0
    %v1758 = vsel %vm1285, %v1645, 0
    %v1761 = vsel %vm1285, %v1646, 0
    %1763 = vmatpush.bf16.msra.mxu0 0
    %1764 = vmatpush.bf16.msra.mxu0 0
    %1765 = vmatpush.bf16.msra.mxu0 0
    %1766 = vmatpush.bf16.msra.mxu0 0
    %1767 = vmatpush.bf16.msra.mxu0 0
    %1768 = vmatpush.bf16.msra.mxu0 0
    %1769 = vmatpush.bf16.msra.mxu0 %v1664
    %1770 = vmatpush.bf16.msra.mxu0 %v1663
    %1771 = vmatmul.bf16.gmra.mxu0 %v1668
    %v1772 = vpop.f32.mrf.mxu0
    %v1773 = vadd.f32 %v1653, %v1772
    %v1774 = vpop.f32.mrf.mxu0
    %v1775 = vadd.f32 %v1653, %v1774
    %1776 = vmatmul.bf16.gmra.mxu0 %v1671
    %v1777 = vpop.f32.mrf.mxu0
    %v1778 = vadd.f32 %v1653, %v1777
    %v1779 = vpop.f32.mrf.mxu0
    %v1780 = vadd.f32 %v1653, %v1779
    %1781 = vmatmul.bf16.gmra.mxu0 %v1674
    %v1782 = vpop.f32.mrf.mxu0
    %v1783 = vadd.f32 %v1653, %v1782
    %v1784 = vpop.f32.mrf.mxu0
    %v1785 = vadd.f32 %v1653, %v1784
    %1786 = vmatmul.bf16.gmra.mxu0 %v1677
    %v1787 = vpop.f32.mrf.mxu0
    %v1788 = vadd.f32 %v1653, %v1787
    %v1789 = vpop.f32.mrf.mxu0
    %v1790 = vadd.f32 %v1653, %v1789
    %1791 = vmatmul.bf16.gmra.mxu0 %v1680
    %v1792 = vpop.f32.mrf.mxu0
    %v1793 = vadd.f32 %v1653, %v1792
    %v1794 = vpop.f32.mrf.mxu0
    %v1795 = vadd.f32 %v1653, %v1794
    %1796 = vmatmul.bf16.gmra.mxu0 %v1683
    %v1797 = vpop.f32.mrf.mxu0
    %v1798 = vadd.f32 %v1653, %v1797
    %v1799 = vpop.f32.mrf.mxu0
    %v1800 = vadd.f32 %v1653, %v1799
    %1801 = vmatmul.bf16.gmra.mxu0 %v1686
    %v1802 = vpop.f32.mrf.mxu0
    %v1803 = vadd.f32 %v1653, %v1802
    %v1804 = vpop.f32.mrf.mxu0
    %v1805 = vadd.f32 %v1653, %v1804
    %1806 = vmatmul.bf16.gmra.mxu0 %v1689
    %v1807 = vpop.f32.mrf.mxu0
    %v1808 = vadd.f32 %v1653, %v1807
    %v1809 = vpop.f32.mrf.mxu0
    %v1810 = vadd.f32 %v1653, %v1809
    %1811 = vmatmul.bf16.gmra.mxu0 %v1692
    %v1812 = vpop.f32.mrf.mxu0
    %v1813 = vadd.f32 %v1653, %v1812
    %v1814 = vpop.f32.mrf.mxu0
    %v1815 = vadd.f32 %v1653, %v1814
    %1816 = vmatmul.bf16.gmra.mxu0 %v1695
    %v1817 = vpop.f32.mrf.mxu0
    %v1818 = vadd.f32 %v1653, %v1817
    %v1819 = vpop.f32.mrf.mxu0
    %v1820 = vadd.f32 %v1653, %v1819
    %1821 = vmatmul.bf16.gmra.mxu0 %v1698
    %v1822 = vpop.f32.mrf.mxu0
    %v1823 = vadd.f32 %v1653, %v1822
    %v1824 = vpop.f32.mrf.mxu0
    %v1825 = vadd.f32 %v1653, %v1824
    %1826 = vmatmul.bf16.gmra.mxu0 %v1701
    %v1827 = vpop.f32.mrf.mxu0
    %v1828 = vadd.f32 %v1653, %v1827
    %v1829 = vpop.f32.mrf.mxu0
    %v1830 = vadd.f32 %v1653, %v1829
    %1831 = vmatmul.bf16.gmra.mxu0 %v1704
    %v1832 = vpop.f32.mrf.mxu0
    %v1833 = vadd.f32 %v1653, %v1832
    %v1834 = vpop.f32.mrf.mxu0
    %v1835 = vadd.f32 %v1653, %v1834
    %1836 = vmatmul.bf16.gmra.mxu0 %v1707
    %v1837 = vpop.f32.mrf.mxu0
    %v1838 = vadd.f32 %v1653, %v1837
    %v1839 = vpop.f32.mrf.mxu0
    %v1840 = vadd.f32 %v1653, %v1839
    %1841 = vmatmul.bf16.gmra.mxu0 %v1710
    %v1842 = vpop.f32.mrf.mxu0
    %v1843 = vadd.f32 %v1653, %v1842
    %v1844 = vpop.f32.mrf.mxu0
    %v1845 = vadd.f32 %v1653, %v1844
    %1846 = vmatmul.bf16.gmra.mxu0 %v1713
    %v1847 = vpop.f32.mrf.mxu0
    %v1848 = vadd.f32 %v1653, %v1847
    %v1849 = vpop.f32.mrf.mxu0
    %v1850 = vadd.f32 %v1653, %v1849
    %1851 = vmatmul.bf16.gmra.mxu0 %v1716
    %v1852 = vpop.f32.mrf.mxu0
    %v1853 = vadd.f32 %v1653, %v1852
    %v1854 = vpop.f32.mrf.mxu0
    %v1855 = vadd.f32 %v1653, %v1854
    %1856 = vmatmul.bf16.gmra.mxu0 %v1719
    %v1857 = vpop.f32.mrf.mxu0
    %v1858 = vadd.f32 %v1653, %v1857
    %v1859 = vpop.f32.mrf.mxu0
    %v1860 = vadd.f32 %v1653, %v1859
    %1861 = vmatmul.bf16.gmra.mxu0 %v1722
    %v1862 = vpop.f32.mrf.mxu0
    %v1863 = vadd.f32 %v1653, %v1862
    %v1864 = vpop.f32.mrf.mxu0
    %v1865 = vadd.f32 %v1653, %v1864
    %1866 = vmatmul.bf16.gmra.mxu0 %v1725
    %v1867 = vpop.f32.mrf.mxu0
    %v1868 = vadd.f32 %v1653, %v1867
    %v1869 = vpop.f32.mrf.mxu0
    %v1870 = vadd.f32 %v1653, %v1869
    %1871 = vmatmul.bf16.gmra.mxu0 %v1728
    %v1872 = vpop.f32.mrf.mxu0
    %v1873 = vadd.f32 %v1653, %v1872
    %v1874 = vpop.f32.mrf.mxu0
    %v1875 = vadd.f32 %v1653, %v1874
    %1876 = vmatmul.bf16.gmra.mxu0 %v1731
    %v1877 = vpop.f32.mrf.mxu0
    %v1878 = vadd.f32 %v1653, %v1877
    %v1879 = vpop.f32.mrf.mxu0
    %v1880 = vadd.f32 %v1653, %v1879
    %1881 = vmatmul.bf16.gmra.mxu0 %v1734
    %v1882 = vpop.f32.mrf.mxu0
    %v1883 = vadd.f32 %v1653, %v1882
    %v1884 = vpop.f32.mrf.mxu0
    %v1885 = vadd.f32 %v1653, %v1884
    %1886 = vmatmul.bf16.gmra.mxu0 %v1737
    %v1887 = vpop.f32.mrf.mxu0
    %v1888 = vadd.f32 %v1653, %v1887
    %v1889 = vpop.f32.mrf.mxu0
    %v1890 = vadd.f32 %v1653, %v1889
    %1891 = vmatmul.bf16.gmra.mxu0 %v1740
    %v1892 = vpop.f32.mrf.mxu0
    %v1893 = vadd.f32 %v1653, %v1892
    %v1894 = vpop.f32.mrf.mxu0
    %v1895 = vadd.f32 %v1653, %v1894
    %1896 = vmatmul.bf16.gmra.mxu0 %v1743
    %v1897 = vpop.f32.mrf.mxu0
    %v1898 = vadd.f32 %v1653, %v1897
    %v1899 = vpop.f32.mrf.mxu0
    %v1900 = vadd.f32 %v1653, %v1899
    %1901 = vmatmul.bf16.gmra.mxu0 %v1746
    %v1902 = vpop.f32.mrf.mxu0
    %v1903 = vadd.f32 %v1653, %v1902
    %v1904 = vpop.f32.mrf.mxu0
    %v1905 = vadd.f32 %v1653, %v1904
    %1906 = vmatmul.bf16.gmra.mxu0 %v1749
    %v1907 = vpop.f32.mrf.mxu0
    %v1908 = vadd.f32 %v1653, %v1907
    %v1909 = vpop.f32.mrf.mxu0
    %v1910 = vadd.f32 %v1653, %v1909
    %1911 = vmatmul.bf16.gmra.mxu0 %v1752
    %v1912 = vpop.f32.mrf.mxu0
    %v1913 = vadd.f32 %v1653, %v1912
    %v1914 = vpop.f32.mrf.mxu0
    %v1915 = vadd.f32 %v1653, %v1914
    %1916 = vmatmul.bf16.gmra.mxu0 %v1755
    %v1917 = vpop.f32.mrf.mxu0
    %v1918 = vadd.f32 %v1653, %v1917
    %v1919 = vpop.f32.mrf.mxu0
    %v1920 = vadd.f32 %v1653, %v1919
    %1921 = vmatmul.bf16.gmra.mxu0 %v1758
    %v1922 = vpop.f32.mrf.mxu0
    %v1923 = vadd.f32 %v1653, %v1922
    %v1924 = vpop.f32.mrf.mxu0
    %v1925 = vadd.f32 %v1653, %v1924
    %1926 = vmatmul.bf16.gmra.mxu0 %v1761
    %v1927 = vpop.f32.mrf.mxu0
    %v1928 = vadd.f32 %v1653, %v1927
    %v1929 = vpop.f32.mrf.mxu0
    %v1930 = vadd.f32 %v1653, %v1929
    %1931 = vdwg.mxu0
    %v1932 = vld [vmem:[%s99] sm:$0xff]
    %v1933 = vld [vmem:[%s99 + $0x8] sm:$0xff]
    %v1934 = vld [vmem:[%s99 + $0x10] sm:$0xff]
    %v1935 = vld [vmem:[%s99 + $0x18] sm:$0xff]
    %v1936 = vld [vmem:[%s99 + $0x20] sm:$0xff]
    %v1937 = vld [vmem:[%s99 + $0x28] sm:$0xff]
    %v1938 = vld [vmem:[%s99 + $0x30] sm:$0xff]
    %v1939 = vld [vmem:[%s99 + $0x38] sm:$0xff]
    %v1940 = vld [vmem:[%s99 + $0x40] sm:$0xff]
    %v1941 = vld [vmem:[%s99 + $0x48] sm:$0xff]
    %v1942 = vld [vmem:[%s99 + $0x50] sm:$0xff]
    %v1943 = vld [vmem:[%s99 + $0x58] sm:$0xff]
    %v1944 = vld [vmem:[%s99 + $0x60] sm:$0xff]
    %v1945 = vld [vmem:[%s99 + $0x68] sm:$0xff]
    %v1946 = vld [vmem:[%s99 + $0x70] sm:$0xff]
    %v1947 = vld [vmem:[%s99 + $0x78] sm:$0xff]
    %v1948 = vld [vmem:[%s99 + $0x80] sm:$0xff]
    %v1949 = vld [vmem:[%s99 + $0x88] sm:$0xff]
    %v1950 = vld [vmem:[%s99 + $0x90] sm:$0xff]
    %v1951 = vld [vmem:[%s99 + $0x98] sm:$0xff]
    %v1952 = vld [vmem:[%s99 + $0xa0] sm:$0xff]
    %v1953 = vld [vmem:[%s99 + $0xa8] sm:$0xff]
    %v1954 = vld [vmem:[%s99 + $0xb0] sm:$0xff]
    %v1955 = vld [vmem:[%s99 + $0xb8] sm:$0xff]
    %v1956 = vld [vmem:[%s99 + $0xc0] sm:$0xff]
    %v1957 = vld [vmem:[%s99 + $0xc8] sm:$0xff]
    %v1958 = vld [vmem:[%s99 + $0xd0] sm:$0xff]
    %v1959 = vld [vmem:[%s99 + $0xd8] sm:$0xff]
    %v1960 = vld [vmem:[%s99 + $0xe0] sm:$0xff]
    %v1961 = vld [vmem:[%s99 + $0xe8] sm:$0xff]
    %v1962 = vld [vmem:[%s99 + $0xf0] sm:$0xff]
    %v1963 = vld [vmem:[%s99 + $0xf8] sm:$0xff]
    %v1964 = vld [vmem:[%s99 + $0x100] sm:$0xff]
    %v1965 = vld [vmem:[%s99 + $0x108] sm:$0xff]
    %v1966 = vld [vmem:[%s99 + $0x110] sm:$0xff]
    %v1967 = vld [vmem:[%s99 + $0x118] sm:$0xff]
    %v1968 = vld [vmem:[%s99 + $0x120] sm:$0xff]
    %v1969 = vld [vmem:[%s99 + $0x128] sm:$0xff]
    %v1970 = vld [vmem:[%s99 + $0x130] sm:$0xff]
    %v1971 = vld [vmem:[%s99 + $0x138] sm:$0xff]
    %v1972 = vld [vmem:[%s99 + $0x140] sm:$0xff]
    %v1973 = vld [vmem:[%s99 + $0x148] sm:$0xff]
    %v1974 = vld [vmem:[%s99 + $0x150] sm:$0xff]
    %v1975 = vld [vmem:[%s99 + $0x158] sm:$0xff]
    %v1976 = vld [vmem:[%s99 + $0x160] sm:$0xff]
    %v1977 = vld [vmem:[%s99 + $0x168] sm:$0xff]
    %v1978 = vld [vmem:[%s99 + $0x170] sm:$0xff]
    %v1979 = vld [vmem:[%s99 + $0x178] sm:$0xff]
    %v1980 = vld [vmem:[%s99 + $0x180] sm:$0xff]
    %v1981 = vld [vmem:[%s99 + $0x188] sm:$0xff]
    %v1982 = vld [vmem:[%s99 + $0x190] sm:$0xff]
    %v1983 = vld [vmem:[%s99 + $0x198] sm:$0xff]
    %v1984 = vld [vmem:[%s99 + $0x1a0] sm:$0xff]
    %v1985 = vld [vmem:[%s99 + $0x1a8] sm:$0xff]
    %v1986 = vld [vmem:[%s99 + $0x1b0] sm:$0xff]
    %v1987 = vld [vmem:[%s99 + $0x1b8] sm:$0xff]
    %v1988 = vld [vmem:[%s99 + $0x1c0] sm:$0xff]
    %v1989 = vld [vmem:[%s99 + $0x1c8] sm:$0xff]
    %v1990 = vld [vmem:[%s99 + $0x1d0] sm:$0xff]
    %v1991 = vld [vmem:[%s99 + $0x1d8] sm:$0xff]
    %v1992 = vld [vmem:[%s99 + $0x1e0] sm:$0xff]
    %v1993 = vld [vmem:[%s99 + $0x1e8] sm:$0xff]
    %v1994 = vld [vmem:[%s99 + $0x1f0] sm:$0xff]
    %v1995 = vld [vmem:[%s99 + $0x1f8] sm:$0xff]
    %v1996 = vlaneseq
    %v1997 = vand.u32 %v1996, 127
    %1998 = vset.pattern.permute.xlu0 0
    %1999 = vperm.xlu0 %1998, %v1932
    %v2000 = vpop.permute.xlu0 %1999
    %2001 = vset.pattern.permute.xlu0 0
    %2002 = vperm.xlu0 %2001, %v1933
    %v2003 = vpop.permute.xlu0 %2002
    %2004 = vset.pattern.permute.xlu0 0
    %2005 = vperm.xlu0 %2004, %v1934
    %v2006 = vpop.permute.xlu0 %2005
    %2007 = vset.pattern.permute.xlu0 0
    %2008 = vperm.xlu0 %2007, %v1935
    %v2009 = vpop.permute.xlu0 %2008
    %2010 = vset.pattern.permute.xlu0 0
    %2011 = vperm.xlu0 %2010, %v1936
    %v2012 = vpop.permute.xlu0 %2011
    %2013 = vset.pattern.permute.xlu0 0
    %2014 = vperm.xlu0 %2013, %v1937
    %v2015 = vpop.permute.xlu0 %2014
    %2016 = vset.pattern.permute.xlu0 0
    %2017 = vperm.xlu0 %2016, %v1938
    %v2018 = vpop.permute.xlu0 %2017
    %2019 = vset.pattern.permute.xlu0 0
    %2020 = vperm.xlu0 %2019, %v1939
    %v2021 = vpop.permute.xlu0 %2020
    %2022 = vset.pattern.permute.xlu0 0
    %2023 = vperm.xlu0 %2022, %v1940
    %v2024 = vpop.permute.xlu0 %2023
    %2025 = vset.pattern.permute.xlu0 0
    %2026 = vperm.xlu0 %2025, %v1941
    %v2027 = vpop.permute.xlu0 %2026
    %2028 = vset.pattern.permute.xlu0 0
    %2029 = vperm.xlu0 %2028, %v1942
    %v2030 = vpop.permute.xlu0 %2029
    %2031 = vset.pattern.permute.xlu0 0
    %2032 = vperm.xlu0 %2031, %v1943
    %v2033 = vpop.permute.xlu0 %2032
    %2034 = vset.pattern.permute.xlu0 0
    %2035 = vperm.xlu0 %2034, %v1944
    %v2036 = vpop.permute.xlu0 %2035
    %2037 = vset.pattern.permute.xlu0 0
    %2038 = vperm.xlu0 %2037, %v1945
    %v2039 = vpop.permute.xlu0 %2038
    %2040 = vset.pattern.permute.xlu0 0
    %2041 = vperm.xlu0 %2040, %v1946
    %v2042 = vpop.permute.xlu0 %2041
    %2043 = vset.pattern.permute.xlu0 0
    %2044 = vperm.xlu0 %2043, %v1947
    %v2045 = vpop.permute.xlu0 %2044
    %2046 = vset.pattern.permute.xlu0 0
    %2047 = vperm.xlu0 %2046, %v1948
    %v2048 = vpop.permute.xlu0 %2047
    %2049 = vset.pattern.permute.xlu0 0
    %2050 = vperm.xlu0 %2049, %v1949
    %v2051 = vpop.permute.xlu0 %2050
    %2052 = vset.pattern.permute.xlu0 0
    %2053 = vperm.xlu0 %2052, %v1950
    %v2054 = vpop.permute.xlu0 %2053
    %2055 = vset.pattern.permute.xlu0 0
    %2056 = vperm.xlu0 %2055, %v1951
    %v2057 = vpop.permute.xlu0 %2056
    %2058 = vset.pattern.permute.xlu0 0
    %2059 = vperm.xlu0 %2058, %v1952
    %v2060 = vpop.permute.xlu0 %2059
    %2061 = vset.pattern.permute.xlu0 0
    %2062 = vperm.xlu0 %2061, %v1953
    %v2063 = vpop.permute.xlu0 %2062
    %2064 = vset.pattern.permute.xlu0 0
    %2065 = vperm.xlu0 %2064, %v1954
    %v2066 = vpop.permute.xlu0 %2065
    %2067 = vset.pattern.permute.xlu0 0
    %2068 = vperm.xlu0 %2067, %v1955
    %v2069 = vpop.permute.xlu0 %2068
    %2070 = vset.pattern.permute.xlu0 0
    %2071 = vperm.xlu0 %2070, %v1956
    %v2072 = vpop.permute.xlu0 %2071
    %2073 = vset.pattern.permute.xlu0 0
    %2074 = vperm.xlu0 %2073, %v1957
    %v2075 = vpop.permute.xlu0 %2074
    %2076 = vset.pattern.permute.xlu0 0
    %2077 = vperm.xlu0 %2076, %v1958
    %v2078 = vpop.permute.xlu0 %2077
    %2079 = vset.pattern.permute.xlu0 0
    %2080 = vperm.xlu0 %2079, %v1959
    %v2081 = vpop.permute.xlu0 %2080
    %2082 = vset.pattern.permute.xlu0 0
    %2083 = vperm.xlu0 %2082, %v1960
    %v2084 = vpop.permute.xlu0 %2083
    %2085 = vset.pattern.permute.xlu0 0
    %2086 = vperm.xlu0 %2085, %v1961
    %v2087 = vpop.permute.xlu0 %2086
    %2088 = vset.pattern.permute.xlu0 0
    %2089 = vperm.xlu0 %2088, %v1962
    %v2090 = vpop.permute.xlu0 %2089
    %2091 = vset.pattern.permute.xlu0 0
    %2092 = vperm.xlu0 %2091, %v1963
    %v2093 = vpop.permute.xlu0 %2092
    %2094 = vset.pattern.permute.xlu0 0
    %2095 = vperm.xlu0 %2094, %v1964
    %v2096 = vpop.permute.xlu0 %2095
    %2097 = vset.pattern.permute.xlu0 0
    %2098 = vperm.xlu0 %2097, %v1965
    %v2099 = vpop.permute.xlu0 %2098
    %2100 = vset.pattern.permute.xlu0 0
    %2101 = vperm.xlu0 %2100, %v1966
    %v2102 = vpop.permute.xlu0 %2101
    %2103 = vset.pattern.permute.xlu0 0
    %2104 = vperm.xlu0 %2103, %v1967
    %v2105 = vpop.permute.xlu0 %2104
    %2106 = vset.pattern.permute.xlu0 0
    %2107 = vperm.xlu0 %2106, %v1968
    %v2108 = vpop.permute.xlu0 %2107
    %2109 = vset.pattern.permute.xlu0 0
    %2110 = vperm.xlu0 %2109, %v1969
    %v2111 = vpop.permute.xlu0 %2110
    %2112 = vset.pattern.permute.xlu0 0
    %2113 = vperm.xlu0 %2112, %v1970
    %v2114 = vpop.permute.xlu0 %2113
    %2115 = vset.pattern.permute.xlu0 0
    %2116 = vperm.xlu0 %2115, %v1971
    %v2117 = vpop.permute.xlu0 %2116
    %2118 = vset.pattern.permute.xlu0 0
    %2119 = vperm.xlu0 %2118, %v1972
    %v2120 = vpop.permute.xlu0 %2119
    %2121 = vset.pattern.permute.xlu0 0
    %2122 = vperm.xlu0 %2121, %v1973
    %v2123 = vpop.permute.xlu0 %2122
    %2124 = vset.pattern.permute.xlu0 0
    %2125 = vperm.xlu0 %2124, %v1974
    %v2126 = vpop.permute.xlu0 %2125
    %2127 = vset.pattern.permute.xlu0 0
    %2128 = vperm.xlu0 %2127, %v1975
    %v2129 = vpop.permute.xlu0 %2128
    %2130 = vset.pattern.permute.xlu0 0
    %2131 = vperm.xlu0 %2130, %v1976
    %v2132 = vpop.permute.xlu0 %2131
    %2133 = vset.pattern.permute.xlu0 0
    %2134 = vperm.xlu0 %2133, %v1977
    %v2135 = vpop.permute.xlu0 %2134
    %2136 = vset.pattern.permute.xlu0 0
    %2137 = vperm.xlu0 %2136, %v1978
    %v2138 = vpop.permute.xlu0 %2137
    %2139 = vset.pattern.permute.xlu0 0
    %2140 = vperm.xlu0 %2139, %v1979
    %v2141 = vpop.permute.xlu0 %2140
    %2142 = vset.pattern.permute.xlu0 0
    %2143 = vperm.xlu0 %2142, %v1980
    %v2144 = vpop.permute.xlu0 %2143
    %2145 = vset.pattern.permute.xlu0 0
    %2146 = vperm.xlu0 %2145, %v1981
    %v2147 = vpop.permute.xlu0 %2146
    %2148 = vset.pattern.permute.xlu0 0
    %2149 = vperm.xlu0 %2148, %v1982
    %v2150 = vpop.permute.xlu0 %2149
    %2151 = vset.pattern.permute.xlu0 0
    %2152 = vperm.xlu0 %2151, %v1983
    %v2153 = vpop.permute.xlu0 %2152
    %2154 = vset.pattern.permute.xlu0 0
    %2155 = vperm.xlu0 %2154, %v1984
    %v2156 = vpop.permute.xlu0 %2155
    %2157 = vset.pattern.permute.xlu0 0
    %2158 = vperm.xlu0 %2157, %v1985
    %v2159 = vpop.permute.xlu0 %2158
    %2160 = vset.pattern.permute.xlu0 0
    %2161 = vperm.xlu0 %2160, %v1986
    %v2162 = vpop.permute.xlu0 %2161
    %2163 = vset.pattern.permute.xlu0 0
    %2164 = vperm.xlu0 %2163, %v1987
    %v2165 = vpop.permute.xlu0 %2164
    %2166 = vset.pattern.permute.xlu0 0
    %2167 = vperm.xlu0 %2166, %v1988
    %v2168 = vpop.permute.xlu0 %2167
    %2169 = vset.pattern.permute.xlu0 0
    %2170 = vperm.xlu0 %2169, %v1989
    %v2171 = vpop.permute.xlu0 %2170
    %2172 = vset.pattern.permute.xlu0 0
    %2173 = vperm.xlu0 %2172, %v1990
    %v2174 = vpop.permute.xlu0 %2173
    %2175 = vset.pattern.permute.xlu0 0
    %2176 = vperm.xlu0 %2175, %v1991
    %v2177 = vpop.permute.xlu0 %2176
    %2178 = vset.pattern.permute.xlu0 0
    %2179 = vperm.xlu0 %2178, %v1992
    %v2180 = vpop.permute.xlu0 %2179
    %2181 = vset.pattern.permute.xlu0 0
    %2182 = vperm.xlu0 %2181, %v1993
    %v2183 = vpop.permute.xlu0 %2182
    %2184 = vset.pattern.permute.xlu0 0
    %2185 = vperm.xlu0 %2184, %v1994
    %v2186 = vpop.permute.xlu0 %2185
    %2187 = vset.pattern.permute.xlu0 0
    %2188 = vperm.xlu0 %2187, %v1995
    %v2189 = vpop.permute.xlu0 %2188
    %vm2190 = vcmp.eq.s32.totalorder %v2000, %v1997
    %vm2191 = vcmp.eq.s32.totalorder %v2003, %v1997
    %vm2192 = vcmp.eq.s32.totalorder %v2006, %v1997
    %vm2193 = vcmp.eq.s32.totalorder %v2009, %v1997
    %vm2194 = vcmp.eq.s32.totalorder %v2012, %v1997
    %vm2195 = vcmp.eq.s32.totalorder %v2015, %v1997
    %vm2196 = vcmp.eq.s32.totalorder %v2018, %v1997
    %vm2197 = vcmp.eq.s32.totalorder %v2021, %v1997
    %vm2198 = vcmp.eq.s32.totalorder %v2024, %v1997
    %vm2199 = vcmp.eq.s32.totalorder %v2027, %v1997
    %vm2200 = vcmp.eq.s32.totalorder %v2030, %v1997
    %vm2201 = vcmp.eq.s32.totalorder %v2033, %v1997
    %vm2202 = vcmp.eq.s32.totalorder %v2036, %v1997
    %vm2203 = vcmp.eq.s32.totalorder %v2039, %v1997
    %vm2204 = vcmp.eq.s32.totalorder %v2042, %v1997
    %vm2205 = vcmp.eq.s32.totalorder %v2045, %v1997
    %vm2206 = vcmp.eq.s32.totalorder %v2048, %v1997
    %vm2207 = vcmp.eq.s32.totalorder %v2051, %v1997
    %vm2208 = vcmp.eq.s32.totalorder %v2054, %v1997
    %vm2209 = vcmp.eq.s32.totalorder %v2057, %v1997
    %vm2210 = vcmp.eq.s32.totalorder %v2060, %v1997
    %vm2211 = vcmp.eq.s32.totalorder %v2063, %v1997
    %vm2212 = vcmp.eq.s32.totalorder %v2066, %v1997
    %vm2213 = vcmp.eq.s32.totalorder %v2069, %v1997
    %vm2214 = vcmp.eq.s32.totalorder %v2072, %v1997
    %vm2215 = vcmp.eq.s32.totalorder %v2075, %v1997
    %vm2216 = vcmp.eq.s32.totalorder %v2078, %v1997
    %vm2217 = vcmp.eq.s32.totalorder %v2081, %v1997
    %vm2218 = vcmp.eq.s32.totalorder %v2084, %v1997
    %vm2219 = vcmp.eq.s32.totalorder %v2087, %v1997
    %vm2220 = vcmp.eq.s32.totalorder %v2090, %v1997
    %vm2221 = vcmp.eq.s32.totalorder %v2093, %v1997
    %vm2222 = vcmp.eq.s32.totalorder %v2096, %v1997
    %vm2223 = vcmp.eq.s32.totalorder %v2099, %v1997
    %vm2224 = vcmp.eq.s32.totalorder %v2102, %v1997
    %vm2225 = vcmp.eq.s32.totalorder %v2105, %v1997
    %vm2226 = vcmp.eq.s32.totalorder %v2108, %v1997
    %vm2227 = vcmp.eq.s32.totalorder %v2111, %v1997
    %vm2228 = vcmp.eq.s32.totalorder %v2114, %v1997
    %vm2229 = vcmp.eq.s32.totalorder %v2117, %v1997
    %vm2230 = vcmp.eq.s32.totalorder %v2120, %v1997
    %vm2231 = vcmp.eq.s32.totalorder %v2123, %v1997
    %vm2232 = vcmp.eq.s32.totalorder %v2126, %v1997
    %vm2233 = vcmp.eq.s32.totalorder %v2129, %v1997
    %vm2234 = vcmp.eq.s32.totalorder %v2132, %v1997
    %vm2235 = vcmp.eq.s32.totalorder %v2135, %v1997
    %vm2236 = vcmp.eq.s32.totalorder %v2138, %v1997
    %vm2237 = vcmp.eq.s32.totalorder %v2141, %v1997
    %vm2238 = vcmp.eq.s32.totalorder %v2144, %v1997
    %vm2239 = vcmp.eq.s32.totalorder %v2147, %v1997
    %vm2240 = vcmp.eq.s32.totalorder %v2150, %v1997
    %vm2241 = vcmp.eq.s32.totalorder %v2153, %v1997
    %vm2242 = vcmp.eq.s32.totalorder %v2156, %v1997
    %vm2243 = vcmp.eq.s32.totalorder %v2159, %v1997
    %vm2244 = vcmp.eq.s32.totalorder %v2162, %v1997
    %vm2245 = vcmp.eq.s32.totalorder %v2165, %v1997
    %vm2246 = vcmp.eq.s32.totalorder %v2168, %v1997
    %vm2247 = vcmp.eq.s32.totalorder %v2171, %v1997
    %vm2248 = vcmp.eq.s32.totalorder %v2174, %v1997
    %vm2249 = vcmp.eq.s32.totalorder %v2177, %v1997
    %vm2250 = vcmp.eq.s32.totalorder %v2180, %v1997
    %vm2251 = vcmp.eq.s32.totalorder %v2183, %v1997
    %vm2252 = vcmp.eq.s32.totalorder %v2186, %v1997
    %vm2253 = vcmp.eq.s32.totalorder %v2189, %v1997
    %v2254 = vsel %vm2190, 1, 0
    %v2255 = vsel %vm2191, 1, 0
    %v2256 = vsel %vm2192, 1, 0
    %v2257 = vsel %vm2193, 1, 0
    %v2258 = vsel %vm2194, 1, 0
    %v2259 = vsel %vm2195, 1, 0
    %v2260 = vsel %vm2196, 1, 0
    %v2261 = vsel %vm2197, 1, 0
    %v2262 = vsel %vm2198, 1, 0
    %v2263 = vsel %vm2199, 1, 0
    %v2264 = vsel %vm2200, 1, 0
    %v2265 = vsel %vm2201, 1, 0
    %v2266 = vsel %vm2202, 1, 0
    %v2267 = vsel %vm2203, 1, 0
    %v2268 = vsel %vm2204, 1, 0
    %v2269 = vsel %vm2205, 1, 0
    %v2270 = vsel %vm2206, 1, 0
    %v2271 = vsel %vm2207, 1, 0
    %v2272 = vsel %vm2208, 1, 0
    %v2273 = vsel %vm2209, 1, 0
    %v2274 = vsel %vm2210, 1, 0
    %v2275 = vsel %vm2211, 1, 0
    %v2276 = vsel %vm2212, 1, 0
    %v2277 = vsel %vm2213, 1, 0
    %v2278 = vsel %vm2214, 1, 0
    %v2279 = vsel %vm2215, 1, 0
    %v2280 = vsel %vm2216, 1, 0
    %v2281 = vsel %vm2217, 1, 0
    %v2282 = vsel %vm2218, 1, 0
    %v2283 = vsel %vm2219, 1, 0
    %v2284 = vsel %vm2220, 1, 0
    %v2285 = vsel %vm2221, 1, 0
    %v2286 = vsel %vm2222, 1, 0
    %v2287 = vsel %vm2223, 1, 0
    %v2288 = vsel %vm2224, 1, 0
    %v2289 = vsel %vm2225, 1, 0
    %v2290 = vsel %vm2226, 1, 0
    %v2291 = vsel %vm2227, 1, 0
    %v2292 = vsel %vm2228, 1, 0
    %v2293 = vsel %vm2229, 1, 0
    %v2294 = vsel %vm2230, 1, 0
    %v2295 = vsel %vm2231, 1, 0
    %v2296 = vsel %vm2232, 1, 0
    %v2297 = vsel %vm2233, 1, 0
    %v2298 = vsel %vm2234, 1, 0
    %v2299 = vsel %vm2235, 1, 0
    %v2300 = vsel %vm2236, 1, 0
    %v2301 = vsel %vm2237, 1, 0
    %v2302 = vsel %vm2238, 1, 0
    %v2303 = vsel %vm2239, 1, 0
    %v2304 = vsel %vm2240, 1, 0
    %v2305 = vsel %vm2241, 1, 0
    %v2306 = vsel %vm2242, 1, 0
    %v2307 = vsel %vm2243, 1, 0
    %v2308 = vsel %vm2244, 1, 0
    %v2309 = vsel %vm2245, 1, 0
    %v2310 = vsel %vm2246, 1, 0
    %v2311 = vsel %vm2247, 1, 0
    %v2312 = vsel %vm2248, 1, 0
    %v2313 = vsel %vm2249, 1, 0
    %v2314 = vsel %vm2250, 1, 0
    %v2315 = vsel %vm2251, 1, 0
    %v2316 = vsel %vm2252, 1, 0
    %v2317 = vsel %vm2253, 1, 0
    %v2318 = vcvt.s32.f32 %v2254
    %v2319 = vcvt.s32.f32 %v2255
    %v2320 = vcvt.s32.f32 %v2256
    %v2321 = vcvt.s32.f32 %v2257
    %v2322 = vcvt.s32.f32 %v2258
    %v2323 = vcvt.s32.f32 %v2259
    %v2324 = vcvt.s32.f32 %v2260
    %v2325 = vcvt.s32.f32 %v2261
    %v2326 = vcvt.s32.f32 %v2262
    %v2327 = vcvt.s32.f32 %v2263
    %v2328 = vcvt.s32.f32 %v2264
    %v2329 = vcvt.s32.f32 %v2265
    %v2330 = vcvt.s32.f32 %v2266
    %v2331 = vcvt.s32.f32 %v2267
    %v2332 = vcvt.s32.f32 %v2268
    %v2333 = vcvt.s32.f32 %v2269
    %v2334 = vcvt.s32.f32 %v2270
    %v2335 = vcvt.s32.f32 %v2271
    %v2336 = vcvt.s32.f32 %v2272
    %v2337 = vcvt.s32.f32 %v2273
    %v2338 = vcvt.s32.f32 %v2274
    %v2339 = vcvt.s32.f32 %v2275
    %v2340 = vcvt.s32.f32 %v2276
    %v2341 = vcvt.s32.f32 %v2277
    %v2342 = vcvt.s32.f32 %v2278
    %v2343 = vcvt.s32.f32 %v2279
    %v2344 = vcvt.s32.f32 %v2280
    %v2345 = vcvt.s32.f32 %v2281
    %v2346 = vcvt.s32.f32 %v2282
    %v2347 = vcvt.s32.f32 %v2283
    %v2348 = vcvt.s32.f32 %v2284
    %v2349 = vcvt.s32.f32 %v2285
    %v2350 = vcvt.s32.f32 %v2286
    %v2351 = vcvt.s32.f32 %v2287
    %v2352 = vcvt.s32.f32 %v2288
    %v2353 = vcvt.s32.f32 %v2289
    %v2354 = vcvt.s32.f32 %v2290
    %v2355 = vcvt.s32.f32 %v2291
    %v2356 = vcvt.s32.f32 %v2292
    %v2357 = vcvt.s32.f32 %v2293
    %v2358 = vcvt.s32.f32 %v2294
    %v2359 = vcvt.s32.f32 %v2295
    %v2360 = vcvt.s32.f32 %v2296
    %v2361 = vcvt.s32.f32 %v2297
    %v2362 = vcvt.s32.f32 %v2298
    %v2363 = vcvt.s32.f32 %v2299
    %v2364 = vcvt.s32.f32 %v2300
    %v2365 = vcvt.s32.f32 %v2301
    %v2366 = vcvt.s32.f32 %v2302
    %v2367 = vcvt.s32.f32 %v2303
    %v2368 = vcvt.s32.f32 %v2304
    %v2369 = vcvt.s32.f32 %v2305
    %v2370 = vcvt.s32.f32 %v2306
    %v2371 = vcvt.s32.f32 %v2307
    %v2372 = vcvt.s32.f32 %v2308
    %v2373 = vcvt.s32.f32 %v2309
    %v2374 = vcvt.s32.f32 %v2310
    %v2375 = vcvt.s32.f32 %v2311
    %v2376 = vcvt.s32.f32 %v2312
    %v2377 = vcvt.s32.f32 %v2313
    %v2378 = vcvt.s32.f32 %v2314
    %v2379 = vcvt.s32.f32 %v2315
    %v2380 = vcvt.s32.f32 %v2316
    %v2381 = vcvt.s32.f32 %v2317
    %v2382 = vpack.c.bf16 %v2319, %v2318
    %v2383 = vpack.c.bf16 %v2321, %v2320
    %v2384 = vpack.c.bf16 %v2323, %v2322
    %v2385 = vpack.c.bf16 %v2325, %v2324
    %v2386 = vpack.c.bf16 %v2327, %v2326
    %v2387 = vpack.c.bf16 %v2329, %v2328
    %v2388 = vpack.c.bf16 %v2331, %v2330
    %v2389 = vpack.c.bf16 %v2333, %v2332
    %v2390 = vpack.c.bf16 %v2335, %v2334
    %v2391 = vpack.c.bf16 %v2337, %v2336
    %v2392 = vpack.c.bf16 %v2339, %v2338
    %v2393 = vpack.c.bf16 %v2341, %v2340
    %v2394 = vpack.c.bf16 %v2343, %v2342
    %v2395 = vpack.c.bf16 %v2345, %v2344
    %v2396 = vpack.c.bf16 %v2347, %v2346
    %v2397 = vpack.c.bf16 %v2349, %v2348
    %v2398 = vpack.c.bf16 %v2351, %v2350
    %v2399 = vpack.c.bf16 %v2353, %v2352
    %v2400 = vpack.c.bf16 %v2355, %v2354
    %v2401 = vpack.c.bf16 %v2357, %v2356
    %v2402 = vpack.c.bf16 %v2359, %v2358
    %v2403 = vpack.c.bf16 %v2361, %v2360
    %v2404 = vpack.c.bf16 %v2363, %v2362
    %v2405 = vpack.c.bf16 %v2365, %v2364
    %v2406 = vpack.c.bf16 %v2367, %v2366
    %v2407 = vpack.c.bf16 %v2369, %v2368
    %v2408 = vpack.c.bf16 %v2371, %v2370
    %v2409 = vpack.c.bf16 %v2373, %v2372
    %v2410 = vpack.c.bf16 %v2375, %v2374
    %v2411 = vpack.c.bf16 %v2377, %v2376
    %v2412 = vpack.c.bf16 %v2379, %v2378
    %v2413 = vpack.c.bf16 %v2381, %v2380
    %v2414 = vld [vmem:[#allocation2] sm:$0x3]
    %v2415 = vpack.c.bf16 %v1775, %v1773
    %v2416 = vpack.c.bf16 %v1780, %v1778
    %v2417 = vpack.c.bf16 %v1785, %v1783
    %v2418 = vpack.c.bf16 %v1790, %v1788
    %v2419 = vpack.c.bf16 %v1795, %v1793
    %v2420 = vpack.c.bf16 %v1800, %v1798
    %v2421 = vpack.c.bf16 %v1805, %v1803
    %v2422 = vpack.c.bf16 %v1810, %v1808
    %v2423 = vpack.c.bf16 %v1815, %v1813
    %v2424 = vpack.c.bf16 %v1820, %v1818
    %v2425 = vpack.c.bf16 %v1825, %v1823
    %v2426 = vpack.c.bf16 %v1830, %v1828
    %v2427 = vpack.c.bf16 %v1835, %v1833
    %v2428 = vpack.c.bf16 %v1840, %v1838
    %v2429 = vpack.c.bf16 %v1845, %v1843
    %v2430 = vpack.c.bf16 %v1850, %v1848
    %v2431 = vpack.c.bf16 %v1855, %v1853
    %v2432 = vpack.c.bf16 %v1860, %v1858
    %v2433 = vpack.c.bf16 %v1865, %v1863
    %v2434 = vpack.c.bf16 %v1870, %v1868
    %v2435 = vpack.c.bf16 %v1875, %v1873
    %v2436 = vpack.c.bf16 %v1880, %v1878
    %v2437 = vpack.c.bf16 %v1885, %v1883
    %v2438 = vpack.c.bf16 %v1890, %v1888
    %v2439 = vpack.c.bf16 %v1895, %v1893
    %v2440 = vpack.c.bf16 %v1900, %v1898
    %v2441 = vpack.c.bf16 %v1905, %v1903
    %v2442 = vpack.c.bf16 %v1910, %v1908
    %v2443 = vpack.c.bf16 %v1915, %v1913
    %v2444 = vpack.c.bf16 %v1920, %v1918
    %v2445 = vpack.c.bf16 %v1925, %v1923
    %v2446 = vpack.c.bf16 %v1930, %v1928
    %2447 = vxpose.xlu0.c.b16.start [1/8] %v2382, 128
    %2448 = vxpose.xlu0.c.b16.cont [2/8] %v2383, 128
    %2449 = vxpose.xlu0.c.b16.cont [3/8] %v2384, 128
    %2450 = vxpose.xlu0.c.b16.cont [4/8] %v2385, 128
    %2451 = vxpose.xlu0.c.b16.cont [5/8] %v2386, 128
    %2452 = vxpose.xlu0.c.b16.cont [6/8] %v2387, 128
    %2453 = vxpose.xlu0.c.b16.cont [7/8] %v2388, 128
    %2454 = vxpose.xlu0.c.b16.end [8/8] %v2389, 128
    %v2455 = vpop.trf.xlu0
    %v2456 = vpop.trf.xlu0
    %v2457 = vpop.trf.xlu0
    %v2458 = vpop.trf.xlu0
    %v2459 = vpop.trf.xlu0
    %v2460 = vpop.trf.xlu0
    %v2461 = vpop.trf.xlu0
    %v2462 = vpop.trf.xlu0
    %2463 = vxpose.xlu0.c.b16.start [1/8] %v2390, 128
    %2464 = vxpose.xlu0.c.b16.cont [2/8] %v2391, 128
    %2465 = vxpose.xlu0.c.b16.cont [3/8] %v2392, 128
    %2466 = vxpose.xlu0.c.b16.cont [4/8] %v2393, 128
    %2467 = vxpose.xlu0.c.b16.cont [5/8] %v2394, 128
    %2468 = vxpose.xlu0.c.b16.cont [6/8] %v2395, 128
    %2469 = vxpose.xlu0.c.b16.cont [7/8] %v2396, 128
    %2470 = vxpose.xlu0.c.b16.end [8/8] %v2397, 128
    %v2471 = vpop.trf.xlu0
    %v2472 = vpop.trf.xlu0
    %v2473 = vpop.trf.xlu0
    %v2474 = vpop.trf.xlu0
    %v2475 = vpop.trf.xlu0
    %v2476 = vpop.trf.xlu0
    %v2477 = vpop.trf.xlu0
    %v2478 = vpop.trf.xlu0
    %2479 = vxpose.xlu0.c.b16.start [1/8] %v2398, 128
    %2480 = vxpose.xlu0.c.b16.cont [2/8] %v2399, 128
    %2481 = vxpose.xlu0.c.b16.cont [3/8] %v2400, 128
    %2482 = vxpose.xlu0.c.b16.cont [4/8] %v2401, 128
    %2483 = vxpose.xlu0.c.b16.cont [5/8] %v2402, 128
    %2484 = vxpose.xlu0.c.b16.cont [6/8] %v2403, 128
    %2485 = vxpose.xlu0.c.b16.cont [7/8] %v2404, 128
    %2486 = vxpose.xlu0.c.b16.end [8/8] %v2405, 128
    %v2487 = vpop.trf.xlu0
    %v2488 = vpop.trf.xlu0
    %v2489 = vpop.trf.xlu0
    %v2490 = vpop.trf.xlu0
    %v2491 = vpop.trf.xlu0
    %v2492 = vpop.trf.xlu0
    %v2493 = vpop.trf.xlu0
    %v2494 = vpop.trf.xlu0
    %2495 = vxpose.xlu0.c.b16.start [1/8] %v2406, 128
    %2496 = vxpose.xlu0.c.b16.cont [2/8] %v2407, 128
    %2497 = vxpose.xlu0.c.b16.cont [3/8] %v2408, 128
    %2498 = vxpose.xlu0.c.b16.cont [4/8] %v2409, 128
    %2499 = vxpose.xlu0.c.b16.cont [5/8] %v2410, 128
    %2500 = vxpose.xlu0.c.b16.cont [6/8] %v2411, 128
    %2501 = vxpose.xlu0.c.b16.cont [7/8] %v2412, 128
    %2502 = vxpose.xlu0.c.b16.end [8/8] %v2413, 128
    %v2503 = vpop.trf.xlu0
    %v2504 = vpop.trf.xlu0
    %v2505 = vpop.trf.xlu0
    %v2506 = vpop.trf.xlu0
    %v2507 = vpop.trf.xlu0
    %v2508 = vpop.trf.xlu0
    %v2509 = vpop.trf.xlu0
    %v2510 = vpop.trf.xlu0
    %2511 = vmatpush.bf16.msra.mxu0 %v2422
    %2512 = vmatpush.bf16.msra.mxu0 %v2421
    %2513 = vmatpush.bf16.msra.mxu0 %v2420
    %2514 = vmatpush.bf16.msra.mxu0 %v2419
    %2515 = vmatpush.bf16.msra.mxu0 %v2418
    %2516 = vmatpush.bf16.msra.mxu0 %v2417
    %2517 = vmatpush.bf16.msra.mxu0 %v2416
    %2518 = vmatpush.bf16.msra.mxu0 %v2415
    %2519 = vmatmul.bf16.gmra.mxu0 %v2455
    %v2520 = vpop.f32.mrf.mxu0
    %v2521 = vadd.f32 0.0, %v2520
    %v2522 = vpop.f32.mrf.mxu0
    %2523 = vdwg.mxu0
    %2524 = vmatpush.bf16.msra.mxu0 %v2430
    %2525 = vmatpush.bf16.msra.mxu0 %v2429
    %2526 = vmatpush.bf16.msra.mxu0 %v2428
    %2527 = vmatpush.bf16.msra.mxu0 %v2427
    %2528 = vmatpush.bf16.msra.mxu0 %v2426
    %2529 = vmatpush.bf16.msra.mxu0 %v2425
    %2530 = vmatpush.bf16.msra.mxu0 %v2424
    %2531 = vmatpush.bf16.msra.mxu0 %v2423
    %2532 = vmatmul.bf16.gmra.mxu0 %v2471
    %v2533 = vpop.f32.mrf.mxu0
    %v2534 = vadd.f32 %v2521, %v2533
    %v2535 = vpop.f32.mrf.mxu0
    %2536 = vdwg.mxu0
    %2537 = vmatpush.bf16.msra.mxu0 %v2438
    %2538 = vmatpush.bf16.msra.mxu0 %v2437
    %2539 = vmatpush.bf16.msra.mxu0 %v2436
    %2540 = vmatpush.bf16.msra.mxu0 %v2435
    %2541 = vmatpush.bf16.msra.mxu0 %v2434
    %2542 = vmatpush.bf16.msra.mxu0 %v2433
    %2543 = vmatpush.bf16.msra.mxu0 %v2432
    %2544 = vmatpush.bf16.msra.mxu0 %v2431
    %2545 = vmatmul.bf16.gmra.mxu0 %v2487
    %v2546 = vpop.f32.mrf.mxu0
    %v2547 = vadd.f32 %v2534, %v2546
    %v2548 = vpop.f32.mrf.mxu0
    %2549 = vdwg.mxu0
    %2550 = vmatpush.bf16.msra.mxu0 %v2446
    %2551 = vmatpush.bf16.msra.mxu0 %v2445
    %2552 = vmatpush.bf16.msra.mxu0 %v2444
    %2553 = vmatpush.bf16.msra.mxu0 %v2443
    %2554 = vmatpush.bf16.msra.mxu0 %v2442
    %2555 = vmatpush.bf16.msra.mxu0 %v2441
    %2556 = vmatpush.bf16.msra.mxu0 %v2440
    %2557 = vmatpush.bf16.msra.mxu0 %v2439
    %2558 = vmatmul.bf16.gmra.mxu0 %v2503
    %v2559 = vpop.f32.mrf.mxu0
    %v2560 = vadd.f32 %v2547, %v2559
    %v2561 = vpop.f32.mrf.mxu0
    %2562 = vdwg.mxu0
    %v2563 = vadd.f32 %v2414, %v2560
    %vm2564 = vcmask 254976
    %2565 = vst.msk [vmem:[#allocation2] sm:$0x3] %vm2564, %v2563
    // Predicated region
    $region46: #{tpu_custom_call.1} parent=1 // pred_check
      _
    $region47: #{tpu_custom_call.1} parent=1 // pred_check_branch
      %2567 = sbr.rel (0) target = $region49
    $region48: #{tpu_custom_call.1} parent=1 // pred_region
      %2569 = vsyncadd [#allocation3], 0
      %s2571 = sshll.u32 [#allocation2], 4
      %s2572 = int_to_ptr.vmem [resolvable:$true] %s2571
      %s2573 = sshll.u32 %s10, 4
      %s2574 = int_to_ptr.hbm [resolvable:$true] %s2573
      %2576 = dma.vmem_to_hbm [thread:$0]  %s2572, 32, %s2574, [#allocation3]
    $region49: #{tpu_custom_call.1} parent=1 // pred_fallthru
      _
    // Predicated region
    $region50: #{tpu_custom_call.1} parent=1 // pred_check
      _
    $region51: #{tpu_custom_call.1} parent=1 // pred_check_branch
      %2578 = sbr.rel (0) target = $region53
    $region52: #{tpu_custom_call.1} parent=1 // pred_region
      %2580 = dma.done [#allocation3], 32
    $region53: #{tpu_custom_call.1} parent=1 // pred_fallthru
      _
    %2581 = vsyncpa [#allocation3], 1

</llo_original>
